<compile_context>
chip_gen: v7x
topology: tpu7x:2x2x1
jax: 0.10.0
libtpu: 0.0.40
codegen_flags: <defaults>
</compile_context>

<pallas_src>
import functools

import jax
import jax.numpy as jnp
from jax.experimental import pallas as pl
from jax.experimental.pallas import tpu as pltpu


def _round_up(x, m):
    return (x + m - 1) // m * m


# ------------------- tiled matmul + bias (vocab projection) -------------------

def _matmul_bias_kernel(x_ref, w_ref, b_ref, o_ref):
    o_ref[...] = (jnp.dot(x_ref[...], w_ref[...],
                          preferred_element_type=jnp.float32)
                  + b_ref[...]).astype(o_ref.dtype)


def matmul_bias(x, w_t, b, *, block_m=512, block_n=512, out_dtype=jnp.float32,
                vmem_limit_bytes=64 * 1024 * 1024):
    """x: (M, K); w_t: (K, N); b: (1, N) -> (M, N), f32 accumulation.

    Grid order is chosen adaptively so the operand with the larger total HBM
    re-stream cost is the one read exactly once (for a real vocab that is the
    (K, N) weight).  K stays un-tiled.
    """
    # TODO(synk): add a K grid axis with an f32 VMEM accumulator once K > ~2-4K.
    M, K = x.shape
    N = w_t.shape[1]
    bm = min(block_m, _round_up(M, 8))
    bn = min(block_n, _round_up(N, 128))
    Mp, Np = _round_up(M, bm), _round_up(N, bn)
    if Mp != M:
        x = jnp.pad(x, ((0, Mp - M), (0, 0)))
    if Np != N:
        w_t = jnp.pad(w_t, ((0, 0), (0, Np - N)))
        b = jnp.pad(b, ((0, 0), (0, Np - N)))
    gm, gn = Mp // bm, Np // bn

    x_bytes = Mp * K * x.dtype.itemsize
    w_bytes = K * Np * w_t.dtype.itemsize
    # Order A (N fastest): x block stationary, weight re-streamed gm times.
    # Order B (M fastest): weight tile stationary, x re-streamed gn times.
    traffic_a = x_bytes + w_bytes * gm
    traffic_b = w_bytes + x_bytes * gn
    if traffic_a <= traffic_b:
        grid = (gm, gn)
        x_map = lambda i, j: (i, 0)
        w_map = lambda i, j: (0, j)
        o_map = lambda i, j: (i, j)
    else:
        grid = (gn, gm)
        x_map = lambda j, i: (i, 0)
        w_map = lambda j, i: (0, j)
        o_map = lambda j, i: (i, j)

    out = pl.pallas_call(
        _matmul_bias_kernel,
        out_shape=jax.ShapeDtypeStruct((Mp, Np), out_dtype),
        grid_spec=pltpu.PrefetchScalarGridSpec(
            num_scalar_prefetch=0,
            grid=grid,
            in_specs=[
                pl.BlockSpec((bm, K), x_map),
                pl.BlockSpec((K, bn), w_map),
                pl.BlockSpec((1, bn), w_map),
            ],
            out_specs=pl.BlockSpec((bm, bn), o_map),
        ),
        compiler_params=pltpu.CompilerParams(
            dimension_semantics=("parallel", "parallel"),
            vmem_limit_bytes=vmem_limit_bytes),
    )(x, w_t, b)
    return out[:M, :N]


# ----------------------- fused LSTM layer kernel -----------------------------

def _lstm_layer_kernel(x_ref, wih_hbm, whh_hbm, b_ref, h0_ref, c0_ref,
                       out_ref, hf_ref, cf_ref,
                       wih_sc, whh_sc, gx_sc, h_sc, c_sc, dma_sem,
                       *, seq_len, chunk, unroll):
    # x_ref  : (Tc, B, IN) bf16   time chunk of layer input
    # wih/whh: HBM refs (IN,4H)/(H,4H) bf16, copied once into VMEM scratch
    # b_ref  : (1, 4H) f32        b_ih + b_hh, gate order [i, f, o, g]
    # out_ref: (Tc, B, H) bf16    hidden-state slab for this chunk
    # hf/cf  : (B, H) f32         final state (resident output, overwritten per chunk)
    tc, B, IN = x_ref.shape
    H = c_sc.shape[1]

    @pl.when(pl.program_id(0) == 0)
    def _():
        cp_w = pltpu.make_async_copy(wih_hbm, wih_sc, dma_sem.at[0])
        cp_h = pltpu.make_async_copy(whh_hbm, whh_sc, dma_sem.at[1])
        cp_w.start()
        cp_h.start()
        h_sc[...] = h0_ref[...].astype(h_sc.dtype)
        c_sc[...] = c0_ref[...]
        cp_w.wait()
        cp_h.wait()

    # Hoisted input projection for the whole chunk (MXU, off the serial path).
    x2d = x_ref[...].reshape(tc * B, IN)
    gx = jnp.dot(x2d, wih_sc[...], preferred_element_type=jnp.float32) + b_ref[...]
    gx_sc[...] = gx.reshape(tc, B, 4 * H)

    needs_mask = (seq_len % chunk) != 0   # static Python bool
    base_t = pl.program_id(0) * chunk

    def step(tt, carry):
        # Only h @ Whh^T remains on the serial critical path.
        gates = gx_sc[tt] + jnp.dot(h_sc[...], whh_sc[...],
                                    preferred_element_type=jnp.float32)   # (B,4H) f32
        sig = jax.nn.sigmoid(gates[:, :3 * H])       # one EUP pass for i, f, o
        g = jnp.tanh(gates[:, 3 * H:])
        c_new = sig[:, H:2 * H] * c_sc[...] + sig[:, :H] * g
        h_new = (sig[:, 2 * H:3 * H] * jnp.tanh(c_new)).astype(h_sc.dtype)
        if needs_mask:
            valid = (base_t + tt) < seq_len
            c_new = jnp.where(valid, c_new, c_sc[...])
            h_new = jnp.where(valid, h_new, h_sc[...])
        c_sc[...] = c_new
        h_sc[...] = h_new
        out_ref[tt] = h_new
        return carry

    jax.lax.fori_loop(0, tc, step, 0, unroll=unroll)

    hf_ref[...] = h_sc[...].astype(hf_ref.dtype)
    cf_ref[...] = c_sc[...]


def lstm_layer(xs, wih_t, whh_t, bias, h0, c0, *, out_dtype=jnp.bfloat16,
               chunk_cap=32, unroll=8, vmem_limit_bytes=64 * 1024 * 1024):
    """xs: (T, B, IN) compute-dtype; wih_t: (IN,4H); whh_t: (H,4H); bias: (1,4H) f32;
    h0, c0: (B, H) f32.  Returns (hidden (T,B,H), h_final (B,H) f32, c_final)."""
    T, B, IN = xs.shape
    H = h0.shape[1]
    tc = min(chunk_cap, T)
    Tp = _round_up(T, tc)
    if Tp != T:
        xs = jnp.pad(xs, ((0, Tp - T), (0, 0), (0, 0)))

    kernel = functools.partial(_lstm_layer_kernel, seq_len=T, chunk=tc,
                               unroll=min(unroll, tc))
    grid_spec = pltpu.PrefetchScalarGridSpec(
        num_scalar_prefetch=0,
        grid=(Tp // tc,),
        in_specs=[
            pl.BlockSpec((tc, B, IN), lambda i: (i, 0, 0)),
            pl.BlockSpec(memory_space=pl.ANY),          # Wih^T, copied once
            pl.BlockSpec(memory_space=pl.ANY),          # Whh^T, copied once
            pl.BlockSpec((1, 4 * H), lambda i: (0, 0)),
            pl.BlockSpec((B, H), lambda i: (0, 0)),
            pl.BlockSpec((B, H), lambda i: (0, 0)),
        ],
        out_specs=[
            pl.BlockSpec((tc, B, H), lambda i: (i, 0, 0)),
            pl.BlockSpec((B, H), lambda i: (0, 0)),
            pl.BlockSpec((B, H), lambda i: (0, 0)),
        ],
        scratch_shapes=[
            pltpu.VMEM((IN, 4 * H), wih_t.dtype),       # single-buffered Wih
            pltpu.VMEM((H, 4 * H), whh_t.dtype),        # single-buffered Whh
            pltpu.VMEM((tc, B, 4 * H), jnp.float32),    # per-chunk gx
            pltpu.VMEM((B, H), out_dtype),              # recurrent h (compute dtype)
            pltpu.VMEM((B, H), jnp.float32),            # cell state c (f32)
            pltpu.SemaphoreType.DMA((2,)),
        ],
    )
    out, hf, cf = pl.pallas_call(
        kernel,
        out_shape=(jax.ShapeDtypeStruct((Tp, B, H), out_dtype),
                   jax.ShapeDtypeStruct((B, H), jnp.float32),
                   jax.ShapeDtypeStruct((B, H), jnp.float32)),
        grid_spec=grid_spec,
        compiler_params=pltpu.CompilerParams(
            dimension_semantics=("arbitrary",),
            vmem_limit_bytes=vmem_limit_bytes),
    )(xs, wih_t, whh_t, bias, h0, c0)
    return out[:T], hf, cf


# --------------------------- weight preprocessing ------------------------------

def prepare_params(params, *, compute_dtype=jnp.bfloat16, lane=128):
    """One-time transpose / cast / gate-reorder / vocab-pad of all weights."""
    layers = []
    for (wih, whh, bih, bhh) in params["lstm"]:
        H = whh.shape[1]
        # PyTorch gate order [i, f, g, o] -> [i, f, o, g] (sigmoid gates contiguous).
        perm = jnp.concatenate([jnp.arange(0, 2 * H),
                                jnp.arange(3 * H, 4 * H),
                                jnp.arange(2 * H, 3 * H)])
        layers.append((
            jnp.transpose(wih[perm]).astype(compute_dtype),          # (IN, 4H)
            jnp.transpose(whh[perm]).astype(compute_dtype),          # (H, 4H)
            (bih + bhh)[perm].reshape(1, -1).astype(jnp.float32),    # (1, 4H)
        ))
    V, H = params["lin_w"].shape
    Vp = _round_up(V, lane)
    lin_w_t = jnp.transpose(params["lin_w"]).astype(compute_dtype)   # (H, V)
    lin_w_t = jnp.pad(lin_w_t, ((0, 0), (0, Vp - V)))
    lin_b = jnp.pad(params["lin_b"], (0, Vp - V)).reshape(1, -1).astype(jnp.float32)
    return {"embed": params["embed"], "layers": layers,
            "lin_w_t": lin_w_t, "lin_b": lin_b,
            "vocab_size": V, "compute_dtype": compute_dtype}


# ------------------------------- Full forward --------------------------------

def rnnlm_forward(prep, x_tokens, h0, c0, *, chunk_cap=32):
    """Mirror of RNNLMModel.forward (batch_first tokens).

    x_tokens: (B, T) int32; h0/c0: (L, B, H) f32.
    Returns (logits (B*T, V) f32, (h (L,B,H), c (L,B,H)))."""
    cd = prep["compute_dtype"]
    B, T = x_tokens.shape
    H = h0.shape[-1]

    # Embedding lookup (HBM gather) stays as JAX glue.
    emb = jnp.take(prep["embed"], x_tokens, axis=0)             # (B, T, E) f32
    xs = jnp.transpose(emb, (1, 0, 2))                          # (T, B, E)

    # Pad batch to 16 sublanes for 16-bit compute (8 for f32); padded rows are
    # independent garbage and are sliced off below.
    bmult = 16 if jnp.dtype(cd).itemsize < 4 else 8
    Bp = _round_up(B, bmult)
    if Bp != B:
        xs = jnp.pad(xs, ((0, 0), (0, Bp - B), (0, 0)))
        h0p = jnp.pad(h0, ((0, 0), (0, Bp - B), (0, 0)))
        c0p = jnp.pad(c0, ((0, 0), (0, Bp - B), (0, 0)))
    else:
        h0p, c0p = h0, c0
    xs = xs.astype(cd)

    # TODO(synk): on v7x, pipeline layers as a wavefront over time-chunks across the
    # two TensorCores; the serial recurrence currently uses one core.
    h_finals, c_finals = [], []
    for l, (wih_t, whh_t, bias) in enumerate(prep["layers"]):
        xs, hf, cf = lstm_layer(xs, wih_t, whh_t, bias, h0p[l], c0p[l],
                                out_dtype=cd, chunk_cap=chunk_cap)
        h_finals.append(hf)
        c_finals.append(cf)

    out_seq = xs[:, :B]                                         # (T, B, H)
    flat = jnp.transpose(out_seq, (1, 0, 2)).reshape(B * T, H)  # batch-first flatten
    logits = matmul_bias(flat, prep["lin_w_t"], prep["lin_b"],
                         out_dtype=jnp.float32)                 # (B*T, Vp)
    logits = logits[:, :prep["vocab_size"]]
    h_out = jnp.stack(h_finals)[:, :B]
    c_out = jnp.stack(c_finals)[:, :B]
    return logits, (h_out, c_out)


# --------------------------- Pure-JAX f32 reference -------------------------------

def rnnlm_reference(params, x_tokens, h0, c0):
    B, T = x_tokens.shape
    emb = jnp.take(params["embed"], x_tokens, axis=0)
    xs = jnp.transpose(emb, (1, 0, 2))
    h_finals, c_finals = [], []
    for l, (wih, whh, bih, bhh) in enumerate(params["lstm"]):
        H = whh.shape[1]
        h = h0[l]
        c = c0[l]
        outs = []
        for t in range(T):
            gates = xs[t] @ wih.T + h @ whh.T + bih + bhh
            i = jax.nn.sigmoid(gates[:, 0 * H:1 * H])
            f = jax.nn.sigmoid(gates[:, 1 * H:2 * H])
            g = jnp.tanh(gates[:, 2 * H:3 * H])
            o = jax.nn.sigmoid(gates[:, 3 * H:4 * H])
            c = f * c + i * g
            h = o * jnp.tanh(c)
            outs.append(h)
        xs = jnp.stack(outs)
        h_finals.append(h)
        c_finals.append(c)
    out_seq = jnp.transpose(xs, (1, 0, 2)).reshape(B * T, -1)
    logits = out_seq @ params["lin_w"].T + params["lin_b"]
    return logits, (jnp.stack(h_finals), jnp.stack(c_finals))


# --------------------------------- Params -------------------------------------

def init_params(key, vocab_size, embed_size, hidden_size, num_layers):
    keys = jax.random.split(key, 3 + 4 * num_layers)
    k = 1.0 / jnp.sqrt(hidden_size)
    params = {
        "embed": jax.random.normal(keys[0], (vocab_size, embed_size), jnp.float32),
        "lin_w": jax.random.uniform(keys[1], (vocab_size, hidden_size),
                                    jnp.float32, -k, k),
        "lin_b": jax.random.uniform(keys[2], (vocab_size,), jnp.float32, -k, k),
        "lstm": [],
    }
    for l in range(num_layers):
        in_size = embed_size if l == 0 else hidden_size
        kk = keys[3 + 4 * l:3 + 4 * (l + 1)]
        wih = jax.random.uniform(kk[0], (4 * hidden_size, in_size), jnp.float32, -k, k)
        whh = jax.random.uniform(kk[1], (4 * hidden_size, hidden_size), jnp.float32, -k, k)
        bih = jax.random.uniform(kk[2], (4 * hidden_size,), jnp.float32, -k, k)
        bhh = jax.random.uniform(kk[3], (4 * hidden_size,), jnp.float32, -k, k)
        params["lstm"].append((wih, whh, bih, bhh))
    return params


if __name__ == "__main__":
    VOCAB, EMBED, HIDDEN, LAYERS = 50, 32, 32, 2
    B, T = 2, 8

    key = jax.random.PRNGKey(0)
    kp, kx, kh, kc = jax.random.split(key, 4)
    params = init_params(kp, VOCAB, EMBED, HIDDEN, LAYERS)
    prep = prepare_params(params, compute_dtype=jnp.bfloat16)   # one-time weight prep

    x_tokens = jax.random.randint(kx, (B, T), 0, VOCAB, dtype=jnp.int32)
    h0 = jax.random.normal(kh, (LAYERS, B, HIDDEN), jnp.float32)
    c0 = jax.random.normal(kc, (LAYERS, B, HIDDEN), jnp.float32)

    logits, (h_out, c_out) = rnnlm_forward(prep, x_tokens, h0, c0)
    jax.block_until_ready((logits, h_out, c_out))

    ref_logits, (ref_h, ref_c) = rnnlm_reference(params, x_tokens, h0, c0)
    assert logits.shape == (B * T, VOCAB)
    assert h_out.shape == (LAYERS, B, HIDDEN) and c_out.shape == (LAYERS, B, HIDDEN)
    # bf16 matmul inputs / bf16 carried h (f32 accumulation, f32 cell state) ->
    # loosened tolerance vs the f32 reference.
    assert jnp.allclose(logits, ref_logits, rtol=5e-2, atol=5e-2)
    assert jnp.allclose(h_out, ref_h, rtol=5e-2, atol=5e-2)
    assert jnp.allclose(c_out, ref_c, rtol=5e-2, atol=5e-2)

    print("KERNEL_OK")
</pallas_src>

<mosaic_0001>
module attributes {stable_mosaic.version = 11 : i64} {
  func.func @_lstm_layer_kernel(%arg0: i32, %arg1: memref<8x16x32xbf16, #tpu.memory_space<vmem>>, %arg2: memref<32x128xbf16, #tpu.memory_space<any>>, %arg3: memref<32x128xbf16, #tpu.memory_space<any>>, %arg4: memref<1x128xf32, #tpu.memory_space<vmem>>, %arg5: memref<16x32xf32, #tpu.memory_space<vmem>>, %arg6: memref<16x32xf32, #tpu.memory_space<vmem>>, %arg7: memref<8x16x32xbf16, #tpu.memory_space<vmem>>, %arg8: memref<16x32xf32, #tpu.memory_space<vmem>>, %arg9: memref<16x32xf32, #tpu.memory_space<vmem>>, %arg10: memref<32x128xbf16, #tpu.memory_space<vmem>>, %arg11: memref<32x128xbf16, #tpu.memory_space<vmem>>, %arg12: memref<8x16x128xf32, #tpu.memory_space<vmem>>, %arg13: memref<16x32xbf16, #tpu.memory_space<vmem>>, %arg14: memref<16x32xf32, #tpu.memory_space<vmem>>, %arg15: memref<2x!tpu.dma_semaphore, #tpu.memory_space<semaphore_mem>>) attributes {dimension_semantics = [#tpu.dimension_semantics<arbitrary>], iteration_bounds = array<i64: 1>, scalar_prefetch = 0 : i64, scratch_operands = 6 : i64, tpu.core_type = #tpu.core_type<tc>, window_params = [{transform_indices = @transform_0, window_bounds = array<i64: 8, 16, 32>}, {}, {}, {pipeline_mode = #tpu.pipeline_mode<synchronous>, transform_indices = @transform_3, window_bounds = array<i64: 1, 128>}, {pipeline_mode = #tpu.pipeline_mode<synchronous>, transform_indices = @transform_4, window_bounds = array<i64: 16, 32>}, {pipeline_mode = #tpu.pipeline_mode<synchronous>, transform_indices = @transform_5, window_bounds = array<i64: 16, 32>}, {transform_indices = @transform_6, window_bounds = array<i64: 8, 16, 32>}, {pipeline_mode = #tpu.pipeline_mode<synchronous>, transform_indices = @transform_7, window_bounds = array<i64: 16, 32>}, {pipeline_mode = #tpu.pipeline_mode<synchronous>, transform_indices = @transform_8, window_bounds = array<i64: 16, 32>}]} {
    %c0_i32 = arith.constant 0 : i32
    %0 = arith.cmpi eq, %arg0, %c0_i32 : i32
    %1 = arith.extui %0 : i1 to i32
    %c0_i32_0 = arith.constant 0 : i32
    %2 = arith.cmpi ne, %1, %c0_i32_0 : i32
    scf.if %2 {
      %c0_i32_147 = arith.constant 0 : i32
      %265 = tpu.memref_slice %arg15[%c0_i32_147] : memref<2x!tpu.dma_semaphore, #tpu.memory_space<semaphore_mem>> -> memref<1x!tpu.dma_semaphore, #tpu.memory_space<semaphore_mem>>
      %266 = tpu.memref_squeeze %265 : memref<1x!tpu.dma_semaphore, #tpu.memory_space<semaphore_mem>> -> memref<!tpu.dma_semaphore, #tpu.memory_space<semaphore_mem>>
      tpu.enqueue_dma source(%arg2 : memref<32x128xbf16, #tpu.memory_space<any>>) target(%arg10 : memref<32x128xbf16, #tpu.memory_space<vmem>>) target_semaphore(%266 : memref<!tpu.dma_semaphore, #tpu.memory_space<semaphore_mem>>)
      %c1_i32_148 = arith.constant 1 : i32
      %267 = tpu.memref_slice %arg15[%c1_i32_148] : memref<2x!tpu.dma_semaphore, #tpu.memory_space<semaphore_mem>> -> memref<1x!tpu.dma_semaphore, #tpu.memory_space<semaphore_mem>>
      %268 = tpu.memref_squeeze %267 : memref<1x!tpu.dma_semaphore, #tpu.memory_space<semaphore_mem>> -> memref<!tpu.dma_semaphore, #tpu.memory_space<semaphore_mem>>
      tpu.enqueue_dma source(%arg3 : memref<32x128xbf16, #tpu.memory_space<any>>) target(%arg11 : memref<32x128xbf16, #tpu.memory_space<vmem>>) target_semaphore(%268 : memref<!tpu.dma_semaphore, #tpu.memory_space<semaphore_mem>>)
      %c0_149 = arith.constant 0 : index
      %c0_150 = arith.constant 0 : index
      %269 = vector.load %arg5[%c0_149, %c0_150] : memref<16x32xf32, #tpu.memory_space<vmem>>, vector<16x32xf32>
      %270 = arith.truncf %269 : vector<16x32xf32> to vector<16x32xbf16>
      %c0_151 = arith.constant 0 : index
      %c0_152 = arith.constant 0 : index
      %271 = vector.load %arg13[%c0_151, %c0_152] : memref<16x32xbf16, #tpu.memory_space<vmem>>, vector<16x32xbf16>
      tpu.vector_store %arg13[%c0_151, %c0_152], %270 {strides = array<i32>} : memref<16x32xbf16, #tpu.memory_space<vmem>>, vector<16x32xbf16>,
      %c0_153 = arith.constant 0 : index
      %c0_154 = arith.constant 0 : index
      %272 = vector.load %arg6[%c0_153, %c0_154] : memref<16x32xf32, #tpu.memory_space<vmem>>, vector<16x32xf32>
      %c0_155 = arith.constant 0 : index
      %c0_156 = arith.constant 0 : index
      %273 = vector.load %arg14[%c0_155, %c0_156] : memref<16x32xf32, #tpu.memory_space<vmem>>, vector<16x32xf32>
      tpu.vector_store %arg14[%c0_155, %c0_156], %272 {strides = array<i32>} : memref<16x32xf32, #tpu.memory_space<vmem>>, vector<16x32xf32>,
      %c0_i32_157 = arith.constant 0 : i32
      %274 = tpu.memref_slice %arg15[%c0_i32_157] : memref<2x!tpu.dma_semaphore, #tpu.memory_space<semaphore_mem>> -> memref<1x!tpu.dma_semaphore, #tpu.memory_space<semaphore_mem>>
      %275 = tpu.memref_squeeze %274 : memref<1x!tpu.dma_semaphore, #tpu.memory_space<semaphore_mem>> -> memref<!tpu.dma_semaphore, #tpu.memory_space<semaphore_mem>>
      tpu.wait_dma2 semaphore(%275 : memref<!tpu.dma_semaphore, #tpu.memory_space<semaphore_mem>>) src(%arg2 : memref<32x128xbf16, #tpu.memory_space<any>>) dst(%arg10 : memref<32x128xbf16, #tpu.memory_space<vmem>>)
      %c1_i32_158 = arith.constant 1 : i32
      %276 = tpu.memref_slice %arg15[%c1_i32_158] : memref<2x!tpu.dma_semaphore, #tpu.memory_space<semaphore_mem>> -> memref<1x!tpu.dma_semaphore, #tpu.memory_space<semaphore_mem>>
      %277 = tpu.memref_squeeze %276 : memref<1x!tpu.dma_semaphore, #tpu.memory_space<semaphore_mem>> -> memref<!tpu.dma_semaphore, #tpu.memory_space<semaphore_mem>>
      tpu.wait_dma2 semaphore(%277 : memref<!tpu.dma_semaphore, #tpu.memory_space<semaphore_mem>>) src(%arg3 : memref<32x128xbf16, #tpu.memory_space<any>>) dst(%arg11 : memref<32x128xbf16, #tpu.memory_space<vmem>>)
    } else {
    }
    %c0 = arith.constant 0 : index
    %c0_1 = arith.constant 0 : index
    %c0_2 = arith.constant 0 : index
    %3 = vector.load %arg1[%c0, %c0_1, %c0_2] : memref<8x16x32xbf16, #tpu.memory_space<vmem>>, vector<8x16x32xbf16>
    %4 = vector.shape_cast %3 : vector<8x16x32xbf16> to vector<128x32xbf16>
    %c0_3 = arith.constant 0 : index
    %c0_4 = arith.constant 0 : index
    %5 = vector.load %arg10[%c0_3, %c0_4] : memref<32x128xbf16, #tpu.memory_space<vmem>>, vector<32x128xbf16>
    %cst = arith.constant dense<0.000000e+00> : vector<128x128xf32>
    %6 = tpu.matmul %4, %5, %cst {dimension_numbers = #tpu.dot_dimension_numbers<[1], [0], [0], [1], [0, 0, 1, 1], [], []>} : vector<128x32xbf16>, vector<32x128xbf16>, vector<128x128xf32> -> vector<128x128xf32>
    %c0_5 = arith.constant 0 : index
    %c0_6 = arith.constant 0 : index
    %7 = vector.load %arg4[%c0_5, %c0_6] : memref<1x128xf32, #tpu.memory_space<vmem>>, vector<1x128xf32>
    %8 = vector.broadcast %7 : vector<1x128xf32> to vector<128x128xf32>
    %9 = arith.addf %6, %8 : vector<128x128xf32>
    %10 = vector.shape_cast %9 : vector<128x128xf32> to vector<8x16x128xf32>
    %c0_7 = arith.constant 0 : index
    %c0_8 = arith.constant 0 : index
    %c0_9 = arith.constant 0 : index
    %11 = vector.load %arg12[%c0_7, %c0_8, %c0_9] : memref<8x16x128xf32, #tpu.memory_space<vmem>>, vector<8x16x128xf32>
    tpu.vector_store %arg12[%c0_7, %c0_8, %c0_9], %10 {strides = array<i32>} : memref<8x16x128xf32, #tpu.memory_space<vmem>>, vector<8x16x128xf32>,
    %c0_i32_10 = arith.constant 0 : i32
    %12 = arith.index_cast %c0_i32_10 : i32 to index
    %c0_11 = arith.constant 0 : index
    %c0_12 = arith.constant 0 : index
    %13 = vector.load %arg12[%12, %c0_11, %c0_12] : memref<8x16x128xf32, #tpu.memory_space<vmem>>, vector<1x16x128xf32>
    %14 = vector.shape_cast %13 : vector<1x16x128xf32> to vector<16x128xf32>
    %c0_13 = arith.constant 0 : index
    %c0_14 = arith.constant 0 : index
    %15 = vector.load %arg13[%c0_13, %c0_14] : memref<16x32xbf16, #tpu.memory_space<vmem>>, vector<16x32xbf16>
    %c0_15 = arith.constant 0 : index
    %c0_16 = arith.constant 0 : index
    %16 = vector.load %arg11[%c0_15, %c0_16] : memref<32x128xbf16, #tpu.memory_space<vmem>>, vector<32x128xbf16>
    %cst_17 = arith.constant dense<0.000000e+00> : vector<16x128xf32>
    %17 = tpu.matmul %15, %16, %cst_17 {dimension_numbers = #tpu.dot_dimension_numbers<[1], [0], [0], [1], [0, 0, 1, 1], [], []>} : vector<16x32xbf16>, vector<32x128xbf16>, vector<16x128xf32> -> vector<16x128xf32>
    %18 = arith.addf %14, %17 : vector<16x128xf32>
    %19 = vector.extract_strided_slice %18 {offsets = [0, 0], sizes = [16, 96], strides = [1, 1]} : vector<16x128xf32> to vector<16x96xf32>
    %20 = arith.negf %19 : vector<16x96xf32>
    %21 = math.exp %20 : vector<16x96xf32>
    %cst_18 = arith.constant 1.000000e+00 : f32
    %22 = vector.broadcast %cst_18 : f32 to vector<16x96xf32>
    %23 = arith.addf %22, %21 : vector<16x96xf32>
    %24 = arith.divf %22, %23 : vector<16x96xf32>
    %25 = vector.extract_strided_slice %18 {offsets = [0, 96], sizes = [16, 32], strides = [1, 1]} : vector<16x128xf32> to vector<16x32xf32>
    %26 = math.tanh %25 : vector<16x32xf32>
    %27 = vector.extract_strided_slice %24 {offsets = [0, 32], sizes = [16, 32], strides = [1, 1]} : vector<16x96xf32> to vector<16x32xf32>
    %c0_19 = arith.constant 0 : index
    %c0_20 = arith.constant 0 : index
    %28 = vector.load %arg14[%c0_19, %c0_20] : memref<16x32xf32, #tpu.memory_space<vmem>>, vector<16x32xf32>
    %29 = arith.mulf %27, %28 : vector<16x32xf32>
    %30 = vector.extract_strided_slice %24 {offsets = [0, 0], sizes = [16, 32], strides = [1, 1]} : vector<16x96xf32> to vector<16x32xf32>
    %31 = arith.mulf %30, %26 : vector<16x32xf32>
    %32 = arith.addf %29, %31 : vector<16x32xf32>
    %33 = vector.extract_strided_slice %24 {offsets = [0, 64], sizes = [16, 32], strides = [1, 1]} : vector<16x96xf32> to vector<16x32xf32>
    %34 = math.tanh %32 : vector<16x32xf32>
    %35 = arith.mulf %33, %34 : vector<16x32xf32>
    %36 = arith.truncf %35 : vector<16x32xf32> to vector<16x32xbf16>
    %c0_21 = arith.constant 0 : index
    %c0_22 = arith.constant 0 : index
    %37 = vector.load %arg14[%c0_21, %c0_22] : memref<16x32xf32, #tpu.memory_space<vmem>>, vector<16x32xf32>
    tpu.vector_store %arg14[%c0_21, %c0_22], %32 {strides = array<i32>} : memref<16x32xf32, #tpu.memory_space<vmem>>, vector<16x32xf32>,
    %c0_23 = arith.constant 0 : index
    %c0_24 = arith.constant 0 : index
    %38 = vector.load %arg13[%c0_23, %c0_24] : memref<16x32xbf16, #tpu.memory_space<vmem>>, vector<16x32xbf16>
    tpu.vector_store %arg13[%c0_23, %c0_24], %36 {strides = array<i32>} : memref<16x32xbf16, #tpu.memory_space<vmem>>, vector<16x32xbf16>,
    %39 = arith.index_cast %c0_i32_10 : i32 to index
    %c0_25 = arith.constant 0 : index
    %c0_26 = arith.constant 0 : index
    %40 = vector.load %arg7[%39, %c0_25, %c0_26] : memref<8x16x32xbf16, #tpu.memory_space<vmem>>, vector<1x16x32xbf16>
    %41 = vector.shape_cast %40 : vector<1x16x32xbf16> to vector<16x32xbf16>
    %42 = vector.shape_cast %36 : vector<16x32xbf16> to vector<1x16x32xbf16>
    tpu.vector_store %arg7[%39, %c0_25, %c0_26], %42 {strides = array<i32>} : memref<8x16x32xbf16, #tpu.memory_space<vmem>>, vector<1x16x32xbf16>,
    %c1_i32 = arith.constant 1 : i32
    %43 = arith.index_cast %c1_i32 : i32 to index
    %c0_27 = arith.constant 0 : index
    %c0_28 = arith.constant 0 : index
    %44 = vector.load %arg12[%43, %c0_27, %c0_28] : memref<8x16x128xf32, #tpu.memory_space<vmem>>, vector<1x16x128xf32>
    %45 = vector.shape_cast %44 : vector<1x16x128xf32> to vector<16x128xf32>
    %c0_29 = arith.constant 0 : index
    %c0_30 = arith.constant 0 : index
    %46 = vector.load %arg13[%c0_29, %c0_30] : memref<16x32xbf16, #tpu.memory_space<vmem>>, vector<16x32xbf16>
    %c0_31 = arith.constant 0 : index
    %c0_32 = arith.constant 0 : index
    %47 = vector.load %arg11[%c0_31, %c0_32] : memref<32x128xbf16, #tpu.memory_space<vmem>>, vector<32x128xbf16>
    %cst_33 = arith.constant dense<0.000000e+00> : vector<16x128xf32>
    %48 = tpu.matmul %46, %47, %cst_33 {dimension_numbers = #tpu.dot_dimension_numbers<[1], [0], [0], [1], [0, 0, 1, 1], [], []>} : vector<16x32xbf16>, vector<32x128xbf16>, vector<16x128xf32> -> vector<16x128xf32>
    %49 = arith.addf %45, %48 : vector<16x128xf32>
    %50 = vector.extract_strided_slice %49 {offsets = [0, 0], sizes = [16, 96], strides = [1, 1]} : vector<16x128xf32> to vector<16x96xf32>
    %51 = arith.negf %50 : vector<16x96xf32>
    %52 = math.exp %51 : vector<16x96xf32>
    %cst_34 = arith.constant 1.000000e+00 : f32
    %53 = vector.broadcast %cst_34 : f32 to vector<16x96xf32>
    %54 = arith.addf %53, %52 : vector<16x96xf32>
    %55 = arith.divf %53, %54 : vector<16x96xf32>
    %56 = vector.extract_strided_slice %49 {offsets = [0, 96], sizes = [16, 32], strides = [1, 1]} : vector<16x128xf32> to vector<16x32xf32>
    %57 = math.tanh %56 : vector<16x32xf32>
    %58 = vector.extract_strided_slice %55 {offsets = [0, 32], sizes = [16, 32], strides = [1, 1]} : vector<16x96xf32> to vector<16x32xf32>
    %c0_35 = arith.constant 0 : index
    %c0_36 = arith.constant 0 : index
    %59 = vector.load %arg14[%c0_35, %c0_36] : memref<16x32xf32, #tpu.memory_space<vmem>>, vector<16x32xf32>
    %60 = arith.mulf %58, %59 : vector<16x32xf32>
    %61 = vector.extract_strided_slice %55 {offsets = [0, 0], sizes = [16, 32], strides = [1, 1]} : vector<16x96xf32> to vector<16x32xf32>
    %62 = arith.mulf %61, %57 : vector<16x32xf32>
    %63 = arith.addf %60, %62 : vector<16x32xf32>
    %64 = vector.extract_strided_slice %55 {offsets = [0, 64], sizes = [16, 32], strides = [1, 1]} : vector<16x96xf32> to vector<16x32xf32>
    %65 = math.tanh %63 : vector<16x32xf32>
    %66 = arith.mulf %64, %65 : vector<16x32xf32>
    %67 = arith.truncf %66 : vector<16x32xf32> to vector<16x32xbf16>
    %c0_37 = arith.constant 0 : index
    %c0_38 = arith.constant 0 : index
    %68 = vector.load %arg14[%c0_37, %c0_38] : memref<16x32xf32, #tpu.memory_space<vmem>>, vector<16x32xf32>
    tpu.vector_store %arg14[%c0_37, %c0_38], %63 {strides = array<i32>} : memref<16x32xf32, #tpu.memory_space<vmem>>, vector<16x32xf32>,
    %c0_39 = arith.constant 0 : index
    %c0_40 = arith.constant 0 : index
    %69 = vector.load %arg13[%c0_39, %c0_40] : memref<16x32xbf16, #tpu.memory_space<vmem>>, vector<16x32xbf16>
    tpu.vector_store %arg13[%c0_39, %c0_40], %67 {strides = array<i32>} : memref<16x32xbf16, #tpu.memory_space<vmem>>, vector<16x32xbf16>,
    %70 = arith.index_cast %c1_i32 : i32 to index
    %c0_41 = arith.constant 0 : index
    %c0_42 = arith.constant 0 : index
    %71 = vector.load %arg7[%70, %c0_41, %c0_42] : memref<8x16x32xbf16, #tpu.memory_space<vmem>>, vector<1x16x32xbf16>
    %72 = vector.shape_cast %71 : vector<1x16x32xbf16> to vector<16x32xbf16>
    %73 = vector.shape_cast %67 : vector<16x32xbf16> to vector<1x16x32xbf16>
    tpu.vector_store %arg7[%70, %c0_41, %c0_42], %73 {strides = array<i32>} : memref<8x16x32xbf16, #tpu.memory_space<vmem>>, vector<1x16x32xbf16>,
    %c2_i32 = arith.constant 2 : i32
    %74 = arith.index_cast %c2_i32 : i32 to index
    %c0_43 = arith.constant 0 : index
    %c0_44 = arith.constant 0 : index
    %75 = vector.load %arg12[%74, %c0_43, %c0_44] : memref<8x16x128xf32, #tpu.memory_space<vmem>>, vector<1x16x128xf32>
    %76 = vector.shape_cast %75 : vector<1x16x128xf32> to vector<16x128xf32>
    %c0_45 = arith.constant 0 : index
    %c0_46 = arith.constant 0 : index
    %77 = vector.load %arg13[%c0_45, %c0_46] : memref<16x32xbf16, #tpu.memory_space<vmem>>, vector<16x32xbf16>
    %c0_47 = arith.constant 0 : index
    %c0_48 = arith.constant 0 : index
    %78 = vector.load %arg11[%c0_47, %c0_48] : memref<32x128xbf16, #tpu.memory_space<vmem>>, vector<32x128xbf16>
    %cst_49 = arith.constant dense<0.000000e+00> : vector<16x128xf32>
    %79 = tpu.matmul %77, %78, %cst_49 {dimension_numbers = #tpu.dot_dimension_numbers<[1], [0], [0], [1], [0, 0, 1, 1], [], []>} : vector<16x32xbf16>, vector<32x128xbf16>, vector<16x128xf32> -> vector<16x128xf32>
    %80 = arith.addf %76, %79 : vector<16x128xf32>
    %81 = vector.extract_strided_slice %80 {offsets = [0, 0], sizes = [16, 96], strides = [1, 1]} : vector<16x128xf32> to vector<16x96xf32>
    %82 = arith.negf %81 : vector<16x96xf32>
    %83 = math.exp %82 : vector<16x96xf32>
    %cst_50 = arith.constant 1.000000e+00 : f32
    %84 = vector.broadcast %cst_50 : f32 to vector<16x96xf32>
    %85 = arith.addf %84, %83 : vector<16x96xf32>
    %86 = arith.divf %84, %85 : vector<16x96xf32>
    %87 = vector.extract_strided_slice %80 {offsets = [0, 96], sizes = [16, 32], strides = [1, 1]} : vector<16x128xf32> to vector<16x32xf32>
    %88 = math.tanh %87 : vector<16x32xf32>
    %89 = vector.extract_strided_slice %86 {offsets = [0, 32], sizes = [16, 32], strides = [1, 1]} : vector<16x96xf32> to vector<16x32xf32>
    %c0_51 = arith.constant 0 : index
    %c0_52 = arith.constant 0 : index
    %90 = vector.load %arg14[%c0_51, %c0_52] : memref<16x32xf32, #tpu.memory_space<vmem>>, vector<16x32xf32>
    %91 = arith.mulf %89, %90 : vector<16x32xf32>
    %92 = vector.extract_strided_slice %86 {offsets = [0, 0], sizes = [16, 32], strides = [1, 1]} : vector<16x96xf32> to vector<16x32xf32>
    %93 = arith.mulf %92, %88 : vector<16x32xf32>
    %94 = arith.addf %91, %93 : vector<16x32xf32>
    %95 = vector.extract_strided_slice %86 {offsets = [0, 64], sizes = [16, 32], strides = [1, 1]} : vector<16x96xf32> to vector<16x32xf32>
    %96 = math.tanh %94 : vector<16x32xf32>
    %97 = arith.mulf %95, %96 : vector<16x32xf32>
    %98 = arith.truncf %97 : vector<16x32xf32> to vector<16x32xbf16>
    %c0_53 = arith.constant 0 : index
    %c0_54 = arith.constant 0 : index
    %99 = vector.load %arg14[%c0_53, %c0_54] : memref<16x32xf32, #tpu.memory_space<vmem>>, vector<16x32xf32>
    tpu.vector_store %arg14[%c0_53, %c0_54], %94 {strides = array<i32>} : memref<16x32xf32, #tpu.memory_space<vmem>>, vector<16x32xf32>,
    %c0_55 = arith.constant 0 : index
    %c0_56 = arith.constant 0 : index
    %100 = vector.load %arg13[%c0_55, %c0_56] : memref<16x32xbf16, #tpu.memory_space<vmem>>, vector<16x32xbf16>
    tpu.vector_store %arg13[%c0_55, %c0_56], %98 {strides = array<i32>} : memref<16x32xbf16, #tpu.memory_space<vmem>>, vector<16x32xbf16>,
    %101 = arith.index_cast %c2_i32 : i32 to index
    %c0_57 = arith.constant 0 : index
    %c0_58 = arith.constant 0 : index
    %102 = vector.load %arg7[%101, %c0_57, %c0_58] : memref<8x16x32xbf16, #tpu.memory_space<vmem>>, vector<1x16x32xbf16>
    %103 = vector.shape_cast %102 : vector<1x16x32xbf16> to vector<16x32xbf16>
    %104 = vector.shape_cast %98 : vector<16x32xbf16> to vector<1x16x32xbf16>
    tpu.vector_store %arg7[%101, %c0_57, %c0_58], %104 {strides = array<i32>} : memref<8x16x32xbf16, #tpu.memory_space<vmem>>, vector<1x16x32xbf16>,
    %c3_i32 = arith.constant 3 : i32
    %105 = arith.index_cast %c3_i32 : i32 to index
    %c0_59 = arith.constant 0 : index
    %c0_60 = arith.constant 0 : index
    %106 = vector.load %arg12[%105, %c0_59, %c0_60] : memref<8x16x128xf32, #tpu.memory_space<vmem>>, vector<1x16x128xf32>
    %107 = vector.shape_cast %106 : vector<1x16x128xf32> to vector<16x128xf32>
    %c0_61 = arith.constant 0 : index
    %c0_62 = arith.constant 0 : index
    %108 = vector.load %arg13[%c0_61, %c0_62] : memref<16x32xbf16, #tpu.memory_space<vmem>>, vector<16x32xbf16>
    %c0_63 = arith.constant 0 : index
    %c0_64 = arith.constant 0 : index
    %109 = vector.load %arg11[%c0_63, %c0_64] : memref<32x128xbf16, #tpu.memory_space<vmem>>, vector<32x128xbf16>
    %cst_65 = arith.constant dense<0.000000e+00> : vector<16x128xf32>
    %110 = tpu.matmul %108, %109, %cst_65 {dimension_numbers = #tpu.dot_dimension_numbers<[1], [0], [0], [1], [0, 0, 1, 1], [], []>} : vector<16x32xbf16>, vector<32x128xbf16>, vector<16x128xf32> -> vector<16x128xf32>
    %111 = arith.addf %107, %110 : vector<16x128xf32>
    %112 = vector.extract_strided_slice %111 {offsets = [0, 0], sizes = [16, 96], strides = [1, 1]} : vector<16x128xf32> to vector<16x96xf32>
    %113 = arith.negf %112 : vector<16x96xf32>
    %114 = math.exp %113 : vector<16x96xf32>
    %cst_66 = arith.constant 1.000000e+00 : f32
    %115 = vector.broadcast %cst_66 : f32 to vector<16x96xf32>
    %116 = arith.addf %115, %114 : vector<16x96xf32>
    %117 = arith.divf %115, %116 : vector<16x96xf32>
    %118 = vector.extract_strided_slice %111 {offsets = [0, 96], sizes = [16, 32], strides = [1, 1]} : vector<16x128xf32> to vector<16x32xf32>
    %119 = math.tanh %118 : vector<16x32xf32>
    %120 = vector.extract_strided_slice %117 {offsets = [0, 32], sizes = [16, 32], strides = [1, 1]} : vector<16x96xf32> to vector<16x32xf32>
    %c0_67 = arith.constant 0 : index
    %c0_68 = arith.constant 0 : index
    %121 = vector.load %arg14[%c0_67, %c0_68] : memref<16x32xf32, #tpu.memory_space<vmem>>, vector<16x32xf32>
    %122 = arith.mulf %120, %121 : vector<16x32xf32>
    %123 = vector.extract_strided_slice %117 {offsets = [0, 0], sizes = [16, 32], strides = [1, 1]} : vector<16x96xf32> to vector<16x32xf32>
    %124 = arith.mulf %123, %119 : vector<16x32xf32>
    %125 = arith.addf %122, %124 : vector<16x32xf32>
    %126 = vector.extract_strided_slice %117 {offsets = [0, 64], sizes = [16, 32], strides = [1, 1]} : vector<16x96xf32> to vector<16x32xf32>
    %127 = math.tanh %125 : vector<16x32xf32>
    %128 = arith.mulf %126, %127 : vector<16x32xf32>
    %129 = arith.truncf %128 : vector<16x32xf32> to vector<16x32xbf16>
    %c0_69 = arith.constant 0 : index
    %c0_70 = arith.constant 0 : index
    %130 = vector.load %arg14[%c0_69, %c0_70] : memref<16x32xf32, #tpu.memory_space<vmem>>, vector<16x32xf32>
    tpu.vector_store %arg14[%c0_69, %c0_70], %125 {strides = array<i32>} : memref<16x32xf32, #tpu.memory_space<vmem>>, vector<16x32xf32>,
    %c0_71 = arith.constant 0 : index
    %c0_72 = arith.constant 0 : index
    %131 = vector.load %arg13[%c0_71, %c0_72] : memref<16x32xbf16, #tpu.memory_space<vmem>>, vector<16x32xbf16>
    tpu.vector_store %arg13[%c0_71, %c0_72], %129 {strides = array<i32>} : memref<16x32xbf16, #tpu.memory_space<vmem>>, vector<16x32xbf16>,
    %132 = arith.index_cast %c3_i32 : i32 to index
    %c0_73 = arith.constant 0 : index
    %c0_74 = arith.constant 0 : index
    %133 = vector.load %arg7[%132, %c0_73, %c0_74] : memref<8x16x32xbf16, #tpu.memory_space<vmem>>, vector<1x16x32xbf16>
    %134 = vector.shape_cast %133 : vector<1x16x32xbf16> to vector<16x32xbf16>
    %135 = vector.shape_cast %129 : vector<16x32xbf16> to vector<1x16x32xbf16>
    tpu.vector_store %arg7[%132, %c0_73, %c0_74], %135 {strides = array<i32>} : memref<8x16x32xbf16, #tpu.memory_space<vmem>>, vector<1x16x32xbf16>,
    %c4_i32 = arith.constant 4 : i32
    %136 = arith.index_cast %c4_i32 : i32 to index
    %c0_75 = arith.constant 0 : index
    %c0_76 = arith.constant 0 : index
    %137 = vector.load %arg12[%136, %c0_75, %c0_76] : memref<8x16x128xf32, #tpu.memory_space<vmem>>, vector<1x16x128xf32>
    %138 = vector.shape_cast %137 : vector<1x16x128xf32> to vector<16x128xf32>
    %c0_77 = arith.constant 0 : index
    %c0_78 = arith.constant 0 : index
    %139 = vector.load %arg13[%c0_77, %c0_78] : memref<16x32xbf16, #tpu.memory_space<vmem>>, vector<16x32xbf16>
    %c0_79 = arith.constant 0 : index
    %c0_80 = arith.constant 0 : index
    %140 = vector.load %arg11[%c0_79, %c0_80] : memref<32x128xbf16, #tpu.memory_space<vmem>>, vector<32x128xbf16>
    %cst_81 = arith.constant dense<0.000000e+00> : vector<16x128xf32>
    %141 = tpu.matmul %139, %140, %cst_81 {dimension_numbers = #tpu.dot_dimension_numbers<[1], [0], [0], [1], [0, 0, 1, 1], [], []>} : vector<16x32xbf16>, vector<32x128xbf16>, vector<16x128xf32> -> vector<16x128xf32>
    %142 = arith.addf %138, %141 : vector<16x128xf32>
    %143 = vector.extract_strided_slice %142 {offsets = [0, 0], sizes = [16, 96], strides = [1, 1]} : vector<16x128xf32> to vector<16x96xf32>
    %144 = arith.negf %143 : vector<16x96xf32>
    %145 = math.exp %144 : vector<16x96xf32>
    %cst_82 = arith.constant 1.000000e+00 : f32
    %146 = vector.broadcast %cst_82 : f32 to vector<16x96xf32>
    %147 = arith.addf %146, %145 : vector<16x96xf32>
    %148 = arith.divf %146, %147 : vector<16x96xf32>
    %149 = vector.extract_strided_slice %142 {offsets = [0, 96], sizes = [16, 32], strides = [1, 1]} : vector<16x128xf32> to vector<16x32xf32>
    %150 = math.tanh %149 : vector<16x32xf32>
    %151 = vector.extract_strided_slice %148 {offsets = [0, 32], sizes = [16, 32], strides = [1, 1]} : vector<16x96xf32> to vector<16x32xf32>
    %c0_83 = arith.constant 0 : index
    %c0_84 = arith.constant 0 : index
    %152 = vector.load %arg14[%c0_83, %c0_84] : memref<16x32xf32, #tpu.memory_space<vmem>>, vector<16x32xf32>
    %153 = arith.mulf %151, %152 : vector<16x32xf32>
    %154 = vector.extract_strided_slice %148 {offsets = [0, 0], sizes = [16, 32], strides = [1, 1]} : vector<16x96xf32> to vector<16x32xf32>
    %155 = arith.mulf %154, %150 : vector<16x32xf32>
    %156 = arith.addf %153, %155 : vector<16x32xf32>
    %157 = vector.extract_strided_slice %148 {offsets = [0, 64], sizes = [16, 32], strides = [1, 1]} : vector<16x96xf32> to vector<16x32xf32>
    %158 = math.tanh %156 : vector<16x32xf32>
    %159 = arith.mulf %157, %158 : vector<16x32xf32>
    %160 = arith.truncf %159 : vector<16x32xf32> to vector<16x32xbf16>
    %c0_85 = arith.constant 0 : index
    %c0_86 = arith.constant 0 : index
    %161 = vector.load %arg14[%c0_85, %c0_86] : memref<16x32xf32, #tpu.memory_space<vmem>>, vector<16x32xf32>
    tpu.vector_store %arg14[%c0_85, %c0_86], %156 {strides = array<i32>} : memref<16x32xf32, #tpu.memory_space<vmem>>, vector<16x32xf32>,
    %c0_87 = arith.constant 0 : index
    %c0_88 = arith.constant 0 : index
    %162 = vector.load %arg13[%c0_87, %c0_88] : memref<16x32xbf16, #tpu.memory_space<vmem>>, vector<16x32xbf16>
    tpu.vector_store %arg13[%c0_87, %c0_88], %160 {strides = array<i32>} : memref<16x32xbf16, #tpu.memory_space<vmem>>, vector<16x32xbf16>,
    %163 = arith.index_cast %c4_i32 : i32 to index
    %c0_89 = arith.constant 0 : index
    %c0_90 = arith.constant 0 : index
    %164 = vector.load %arg7[%163, %c0_89, %c0_90] : memref<8x16x32xbf16, #tpu.memory_space<vmem>>, vector<1x16x32xbf16>
    %165 = vector.shape_cast %164 : vector<1x16x32xbf16> to vector<16x32xbf16>
    %166 = vector.shape_cast %160 : vector<16x32xbf16> to vector<1x16x32xbf16>
    tpu.vector_store %arg7[%163, %c0_89, %c0_90], %166 {strides = array<i32>} : memref<8x16x32xbf16, #tpu.memory_space<vmem>>, vector<1x16x32xbf16>,
    %c5_i32 = arith.constant 5 : i32
    %167 = arith.index_cast %c5_i32 : i32 to index
    %c0_91 = arith.constant 0 : index
    %c0_92 = arith.constant 0 : index
    %168 = vector.load %arg12[%167, %c0_91, %c0_92] : memref<8x16x128xf32, #tpu.memory_space<vmem>>, vector<1x16x128xf32>
    %169 = vector.shape_cast %168 : vector<1x16x128xf32> to vector<16x128xf32>
    %c0_93 = arith.constant 0 : index
    %c0_94 = arith.constant 0 : index
    %170 = vector.load %arg13[%c0_93, %c0_94] : memref<16x32xbf16, #tpu.memory_space<vmem>>, vector<16x32xbf16>
    %c0_95 = arith.constant 0 : index
    %c0_96 = arith.constant 0 : index
    %171 = vector.load %arg11[%c0_95, %c0_96] : memref<32x128xbf16, #tpu.memory_space<vmem>>, vector<32x128xbf16>
    %cst_97 = arith.constant dense<0.000000e+00> : vector<16x128xf32>
    %172 = tpu.matmul %170, %171, %cst_97 {dimension_numbers = #tpu.dot_dimension_numbers<[1], [0], [0], [1], [0, 0, 1, 1], [], []>} : vector<16x32xbf16>, vector<32x128xbf16>, vector<16x128xf32> -> vector<16x128xf32>
    %173 = arith.addf %169, %172 : vector<16x128xf32>
    %174 = vector.extract_strided_slice %173 {offsets = [0, 0], sizes = [16, 96], strides = [1, 1]} : vector<16x128xf32> to vector<16x96xf32>
    %175 = arith.negf %174 : vector<16x96xf32>
    %176 = math.exp %175 : vector<16x96xf32>
    %cst_98 = arith.constant 1.000000e+00 : f32
    %177 = vector.broadcast %cst_98 : f32 to vector<16x96xf32>
    %178 = arith.addf %177, %176 : vector<16x96xf32>
    %179 = arith.divf %177, %178 : vector<16x96xf32>
    %180 = vector.extract_strided_slice %173 {offsets = [0, 96], sizes = [16, 32], strides = [1, 1]} : vector<16x128xf32> to vector<16x32xf32>
    %181 = math.tanh %180 : vector<16x32xf32>
    %182 = vector.extract_strided_slice %179 {offsets = [0, 32], sizes = [16, 32], strides = [1, 1]} : vector<16x96xf32> to vector<16x32xf32>
    %c0_99 = arith.constant 0 : index
    %c0_100 = arith.constant 0 : index
    %183 = vector.load %arg14[%c0_99, %c0_100] : memref<16x32xf32, #tpu.memory_space<vmem>>, vector<16x32xf32>
    %184 = arith.mulf %182, %183 : vector<16x32xf32>
    %185 = vector.extract_strided_slice %179 {offsets = [0, 0], sizes = [16, 32], strides = [1, 1]} : vector<16x96xf32> to vector<16x32xf32>
    %186 = arith.mulf %185, %181 : vector<16x32xf32>
    %187 = arith.addf %184, %186 : vector<16x32xf32>
    %188 = vector.extract_strided_slice %179 {offsets = [0, 64], sizes = [16, 32], strides = [1, 1]} : vector<16x96xf32> to vector<16x32xf32>
    %189 = math.tanh %187 : vector<16x32xf32>
    %190 = arith.mulf %188, %189 : vector<16x32xf32>
    %191 = arith.truncf %190 : vector<16x32xf32> to vector<16x32xbf16>
    %c0_101 = arith.constant 0 : index
    %c0_102 = arith.constant 0 : index
    %192 = vector.load %arg14[%c0_101, %c0_102] : memref<16x32xf32, #tpu.memory_space<vmem>>, vector<16x32xf32>
    tpu.vector_store %arg14[%c0_101, %c0_102], %187 {strides = array<i32>} : memref<16x32xf32, #tpu.memory_space<vmem>>, vector<16x32xf32>,
    %c0_103 = arith.constant 0 : index
    %c0_104 = arith.constant 0 : index
    %193 = vector.load %arg13[%c0_103, %c0_104] : memref<16x32xbf16, #tpu.memory_space<vmem>>, vector<16x32xbf16>
    tpu.vector_store %arg13[%c0_103, %c0_104], %191 {strides = array<i32>} : memref<16x32xbf16, #tpu.memory_space<vmem>>, vector<16x32xbf16>,
    %194 = arith.index_cast %c5_i32 : i32 to index
    %c0_105 = arith.constant 0 : index
    %c0_106 = arith.constant 0 : index
    %195 = vector.load %arg7[%194, %c0_105, %c0_106] : memref<8x16x32xbf16, #tpu.memory_space<vmem>>, vector<1x16x32xbf16>
    %196 = vector.shape_cast %195 : vector<1x16x32xbf16> to vector<16x32xbf16>
    %197 = vector.shape_cast %191 : vector<16x32xbf16> to vector<1x16x32xbf16>
    tpu.vector_store %arg7[%194, %c0_105, %c0_106], %197 {strides = array<i32>} : memref<8x16x32xbf16, #tpu.memory_space<vmem>>, vector<1x16x32xbf16>,
    %c6_i32 = arith.constant 6 : i32
    %198 = arith.index_cast %c6_i32 : i32 to index
    %c0_107 = arith.constant 0 : index
    %c0_108 = arith.constant 0 : index
    %199 = vector.load %arg12[%198, %c0_107, %c0_108] : memref<8x16x128xf32, #tpu.memory_space<vmem>>, vector<1x16x128xf32>
    %200 = vector.shape_cast %199 : vector<1x16x128xf32> to vector<16x128xf32>
    %c0_109 = arith.constant 0 : index
    %c0_110 = arith.constant 0 : index
    %201 = vector.load %arg13[%c0_109, %c0_110] : memref<16x32xbf16, #tpu.memory_space<vmem>>, vector<16x32xbf16>
    %c0_111 = arith.constant 0 : index
    %c0_112 = arith.constant 0 : index
    %202 = vector.load %arg11[%c0_111, %c0_112] : memref<32x128xbf16, #tpu.memory_space<vmem>>, vector<32x128xbf16>
    %cst_113 = arith.constant dense<0.000000e+00> : vector<16x128xf32>
    %203 = tpu.matmul %201, %202, %cst_113 {dimension_numbers = #tpu.dot_dimension_numbers<[1], [0], [0], [1], [0, 0, 1, 1], [], []>} : vector<16x32xbf16>, vector<32x128xbf16>, vector<16x128xf32> -> vector<16x128xf32>
    %204 = arith.addf %200, %203 : vector<16x128xf32>
    %205 = vector.extract_strided_slice %204 {offsets = [0, 0], sizes = [16, 96], strides = [1, 1]} : vector<16x128xf32> to vector<16x96xf32>
    %206 = arith.negf %205 : vector<16x96xf32>
    %207 = math.exp %206 : vector<16x96xf32>
    %cst_114 = arith.constant 1.000000e+00 : f32
    %208 = vector.broadcast %cst_114 : f32 to vector<16x96xf32>
    %209 = arith.addf %208, %207 : vector<16x96xf32>
    %210 = arith.divf %208, %209 : vector<16x96xf32>
    %211 = vector.extract_strided_slice %204 {offsets = [0, 96], sizes = [16, 32], strides = [1, 1]} : vector<16x128xf32> to vector<16x32xf32>
    %212 = math.tanh %211 : vector<16x32xf32>
    %213 = vector.extract_strided_slice %210 {offsets = [0, 32], sizes = [16, 32], strides = [1, 1]} : vector<16x96xf32> to vector<16x32xf32>
    %c0_115 = arith.constant 0 : index
    %c0_116 = arith.constant 0 : index
    %214 = vector.load %arg14[%c0_115, %c0_116] : memref<16x32xf32, #tpu.memory_space<vmem>>, vector<16x32xf32>
    %215 = arith.mulf %213, %214 : vector<16x32xf32>
    %216 = vector.extract_strided_slice %210 {offsets = [0, 0], sizes = [16, 32], strides = [1, 1]} : vector<16x96xf32> to vector<16x32xf32>
    %217 = arith.mulf %216, %212 : vector<16x32xf32>
    %218 = arith.addf %215, %217 : vector<16x32xf32>
    %219 = vector.extract_strided_slice %210 {offsets = [0, 64], sizes = [16, 32], strides = [1, 1]} : vector<16x96xf32> to vector<16x32xf32>
    %220 = math.tanh %218 : vector<16x32xf32>
    %221 = arith.mulf %219, %220 : vector<16x32xf32>
    %222 = arith.truncf %221 : vector<16x32xf32> to vector<16x32xbf16>
    %c0_117 = arith.constant 0 : index
    %c0_118 = arith.constant 0 : index
    %223 = vector.load %arg14[%c0_117, %c0_118] : memref<16x32xf32, #tpu.memory_space<vmem>>, vector<16x32xf32>
    tpu.vector_store %arg14[%c0_117, %c0_118], %218 {strides = array<i32>} : memref<16x32xf32, #tpu.memory_space<vmem>>, vector<16x32xf32>,
    %c0_119 = arith.constant 0 : index
    %c0_120 = arith.constant 0 : index
    %224 = vector.load %arg13[%c0_119, %c0_120] : memref<16x32xbf16, #tpu.memory_space<vmem>>, vector<16x32xbf16>
    tpu.vector_store %arg13[%c0_119, %c0_120], %222 {strides = array<i32>} : memref<16x32xbf16, #tpu.memory_space<vmem>>, vector<16x32xbf16>,
    %225 = arith.index_cast %c6_i32 : i32 to index
    %c0_121 = arith.constant 0 : index
    %c0_122 = arith.constant 0 : index
    %226 = vector.load %arg7[%225, %c0_121, %c0_122] : memref<8x16x32xbf16, #tpu.memory_space<vmem>>, vector<1x16x32xbf16>
    %227 = vector.shape_cast %226 : vector<1x16x32xbf16> to vector<16x32xbf16>
    %228 = vector.shape_cast %222 : vector<16x32xbf16> to vector<1x16x32xbf16>
    tpu.vector_store %arg7[%225, %c0_121, %c0_122], %228 {strides = array<i32>} : memref<8x16x32xbf16, #tpu.memory_space<vmem>>, vector<1x16x32xbf16>,
    %c7_i32 = arith.constant 7 : i32
    %229 = arith.index_cast %c7_i32 : i32 to index
    %c0_123 = arith.constant 0 : index
    %c0_124 = arith.constant 0 : index
    %230 = vector.load %arg12[%229, %c0_123, %c0_124] : memref<8x16x128xf32, #tpu.memory_space<vmem>>, vector<1x16x128xf32>
    %231 = vector.shape_cast %230 : vector<1x16x128xf32> to vector<16x128xf32>
    %c0_125 = arith.constant 0 : index
    %c0_126 = arith.constant 0 : index
    %232 = vector.load %arg13[%c0_125, %c0_126] : memref<16x32xbf16, #tpu.memory_space<vmem>>, vector<16x32xbf16>
    %c0_127 = arith.constant 0 : index
    %c0_128 = arith.constant 0 : index
    %233 = vector.load %arg11[%c0_127, %c0_128] : memref<32x128xbf16, #tpu.memory_space<vmem>>, vector<32x128xbf16>
    %cst_129 = arith.constant dense<0.000000e+00> : vector<16x128xf32>
    %234 = tpu.matmul %232, %233, %cst_129 {dimension_numbers = #tpu.dot_dimension_numbers<[1], [0], [0], [1], [0, 0, 1, 1], [], []>} : vector<16x32xbf16>, vector<32x128xbf16>, vector<16x128xf32> -> vector<16x128xf32>
    %235 = arith.addf %231, %234 : vector<16x128xf32>
    %236 = vector.extract_strided_slice %235 {offsets = [0, 0], sizes = [16, 96], strides = [1, 1]} : vector<16x128xf32> to vector<16x96xf32>
    %237 = arith.negf %236 : vector<16x96xf32>
    %238 = math.exp %237 : vector<16x96xf32>
    %cst_130 = arith.constant 1.000000e+00 : f32
    %239 = vector.broadcast %cst_130 : f32 to vector<16x96xf32>
    %240 = arith.addf %239, %238 : vector<16x96xf32>
    %241 = arith.divf %239, %240 : vector<16x96xf32>
    %242 = vector.extract_strided_slice %235 {offsets = [0, 96], sizes = [16, 32], strides = [1, 1]} : vector<16x128xf32> to vector<16x32xf32>
    %243 = math.tanh %242 : vector<16x32xf32>
    %244 = vector.extract_strided_slice %241 {offsets = [0, 32], sizes = [16, 32], strides = [1, 1]} : vector<16x96xf32> to vector<16x32xf32>
    %c0_131 = arith.constant 0 : index
    %c0_132 = arith.constant 0 : index
    %245 = vector.load %arg14[%c0_131, %c0_132] : memref<16x32xf32, #tpu.memory_space<vmem>>, vector<16x32xf32>
    %246 = arith.mulf %244, %245 : vector<16x32xf32>
    %247 = vector.extract_strided_slice %241 {offsets = [0, 0], sizes = [16, 32], strides = [1, 1]} : vector<16x96xf32> to vector<16x32xf32>
    %248 = arith.mulf %247, %243 : vector<16x32xf32>
    %249 = arith.addf %246, %248 : vector<16x32xf32>
    %250 = vector.extract_strided_slice %241 {offsets = [0, 64], sizes = [16, 32], strides = [1, 1]} : vector<16x96xf32> to vector<16x32xf32>
    %251 = math.tanh %249 : vector<16x32xf32>
    %252 = arith.mulf %250, %251 : vector<16x32xf32>
    %253 = arith.truncf %252 : vector<16x32xf32> to vector<16x32xbf16>
    %c0_133 = arith.constant 0 : index
    %c0_134 = arith.constant 0 : index
    %254 = vector.load %arg14[%c0_133, %c0_134] : memref<16x32xf32, #tpu.memory_space<vmem>>, vector<16x32xf32>
    tpu.vector_store %arg14[%c0_133, %c0_134], %249 {strides = array<i32>} : memref<16x32xf32, #tpu.memory_space<vmem>>, vector<16x32xf32>,
    %c0_135 = arith.constant 0 : index
    %c0_136 = arith.constant 0 : index
    %255 = vector.load %arg13[%c0_135, %c0_136] : memref<16x32xbf16, #tpu.memory_space<vmem>>, vector<16x32xbf16>
    tpu.vector_store %arg13[%c0_135, %c0_136], %253 {strides = array<i32>} : memref<16x32xbf16, #tpu.memory_space<vmem>>, vector<16x32xbf16>,
    %256 = arith.index_cast %c7_i32 : i32 to index
    %c0_137 = arith.constant 0 : index
    %c0_138 = arith.constant 0 : index
    %257 = vector.load %arg7[%256, %c0_137, %c0_138] : memref<8x16x32xbf16, #tpu.memory_space<vmem>>, vector<1x16x32xbf16>
    %258 = vector.shape_cast %257 : vector<1x16x32xbf16> to vector<16x32xbf16>
    %259 = vector.shape_cast %253 : vector<16x32xbf16> to vector<1x16x32xbf16>
    tpu.vector_store %arg7[%256, %c0_137, %c0_138], %259 {strides = array<i32>} : memref<8x16x32xbf16, #tpu.memory_space<vmem>>, vector<1x16x32xbf16>,
    %c8_i32 = arith.constant 8 : i32
    %c0_139 = arith.constant 0 : index
    %c0_140 = arith.constant 0 : index
    %260 = vector.load %arg13[%c0_139, %c0_140] : memref<16x32xbf16, #tpu.memory_space<vmem>>, vector<16x32xbf16>
    %261 = arith.extf %260 : vector<16x32xbf16> to vector<16x32xf32>
    %c0_141 = arith.constant 0 : index
    %c0_142 = arith.constant 0 : index
    %262 = vector.load %arg8[%c0_141, %c0_142] : memref<16x32xf32, #tpu.memory_space<vmem>>, vector<16x32xf32>
    tpu.vector_store %arg8[%c0_141, %c0_142], %261 {strides = array<i32>} : memref<16x32xf32, #tpu.memory_space<vmem>>, vector<16x32xf32>,
    %c0_143 = arith.constant 0 : index
    %c0_144 = arith.constant 0 : index
    %263 = vector.load %arg14[%c0_143, %c0_144] : memref<16x32xf32, #tpu.memory_space<vmem>>, vector<16x32xf32>
    %c0_145 = arith.constant 0 : index
    %c0_146 = arith.constant 0 : index
    %264 = vector.load %arg9[%c0_145, %c0_146] : memref<16x32xf32, #tpu.memory_space<vmem>>, vector<16x32xf32>
    tpu.vector_store %arg9[%c0_145, %c0_146], %263 {strides = array<i32>} : memref<16x32xf32, #tpu.memory_space<vmem>>, vector<16x32xf32>,
    return
  }
  func.func @transform_0(%arg0: i32) -> (i32, i32, i32) {
    %c0_i32 = arith.constant 0 : i32
    %c0_i32_0 = arith.constant 0 : i32
    %c0_i32_1 = arith.constant 0 : i32
    return %arg0, %c0_i32, %c0_i32_0 : i32, i32, i32
  }
  func.func @transform_3(%arg0: i32) -> (i32, i32) {
    %c0_i32 = arith.constant 0 : i32
    %c0_i32_0 = arith.constant 0 : i32
    %c0_i32_1 = arith.constant 0 : i32
    return %c0_i32, %c0_i32_0 : i32, i32
  }
  func.func @transform_4(%arg0: i32) -> (i32, i32) {
    %c0_i32 = arith.constant 0 : i32
    %c0_i32_0 = arith.constant 0 : i32
    %c0_i32_1 = arith.constant 0 : i32
    return %c0_i32, %c0_i32_0 : i32, i32
  }
  func.func @transform_5(%arg0: i32) -> (i32, i32) {
    %c0_i32 = arith.constant 0 : i32
    %c0_i32_0 = arith.constant 0 : i32
    %c0_i32_1 = arith.constant 0 : i32
    return %c0_i32, %c0_i32_0 : i32, i32
  }
  func.func @transform_6(%arg0: i32) -> (i32, i32, i32) {
    %c0_i32 = arith.constant 0 : i32
    %c0_i32_0 = arith.constant 0 : i32
    %c0_i32_1 = arith.constant 0 : i32
    return %arg0, %c0_i32, %c0_i32_0 : i32, i32, i32
  }
  func.func @transform_7(%arg0: i32) -> (i32, i32) {
    %c0_i32 = arith.constant 0 : i32
    %c0_i32_0 = arith.constant 0 : i32
    %c0_i32_1 = arith.constant 0 : i32
    return %c0_i32, %c0_i32_0 : i32, i32
  }
  func.func @transform_8(%arg0: i32) -> (i32, i32) {
    %c0_i32 = arith.constant 0 : i32
    %c0_i32_0 = arith.constant 0 : i32
    %c0_i32_1 = arith.constant 0 : i32
    return %c0_i32, %c0_i32_0 : i32, i32
  }
}

</mosaic_0001>

<llo_original>
// kernel: tpu_custom_call.1
$region0: #{tpu_custom_call.1}
  #allocation0 [shape = 'u32[]', space=smem, size = 0x4, offset = 0x4, fixed_abs, tag = 'smem constant byte address 0x4 - core index']
  #allocation1 [shape = 'u32[144,128]{1,0:T(1,128)}', space=vmem, size = 0x12000, scoped, tag = 'internal scratch']
  #allocation2 [shape = 'bf16[32,128]{1,0:T(16,128)(2,1)}', space=vmem, size = 0x2000, scoped, tag = 'scratch operand']
  #allocation3 [shape = 'bf16[32,128]{1,0:T(16,128)(2,1)}', space=vmem, size = 0x2000, scoped, tag = 'scratch operand']
  #allocation4 [shape = 'f32[8,16,128]{2,1,0:T(8,128)}', space=vmem, size = 0x10000, scoped, tag = 'scratch operand']
  #allocation5 [shape = 'bf16[16,32]{1,0:T(16,128)(2,1)}', space=vmem, size = 0x1000, scoped, tag = 'scratch operand']
  #allocation6 [shape = 'f32[16,32]{1,0:T(8,128)}', space=vmem, size = 0x2000, scoped, tag = 'scratch operand']
  #allocation7 [shape = 's32[2]{0}', space=sflag, size = 0x8, scoped, tag = 'scratch operand']
  #allocation20 [shape = 's32[]', space=sflag, size = 0x4, offset = 0, fixed_abs, tag = 'sflag constant byte address 0x0 - dummy sync flag']
  #allocation21 [shape = 's32[]', space=sflag, size = 0x4, offset = 0, fixed_abs, tag = 'sflag constant byte address 0x0 - dummy sync flag']
  #allocation22 [shape = 'u32[]', space=smem, size = 0x4, offset = 0x44, fixed_abs, tag = 'smem constant byte address 0x44 - assertion arg 0']
  #allocation23 [shape = 'u32[]', space=smem, size = 0x4, offset = 0x48, fixed_abs, tag = 'smem constant byte address 0x48 - assertion arg 1']
  #allocation24 [shape = 's32[]', space=sflag, size = 0x4, offset = 0, fixed_abs, tag = 'sflag constant byte address 0x0 - dummy sync flag']
  #allocation25 [shape = 's32[]', space=sflag, size = 0x4, offset = 0, fixed_abs, tag = 'sflag constant byte address 0x0 - dummy sync flag']
  %s0 = inlined_call_operand.hbm [shape: bf16[8,16,32], index: 0, kind: input, shape index: {}]
  %s1 = inlined_call_operand.hbm [shape: bf16[32,128], index: 1, kind: input, shape index: {}]
  %s2 = inlined_call_operand.hbm [shape: bf16[32,128], index: 2, kind: input, shape index: {}]
  %s3 = inlined_call_operand.hbm [shape: f32[1,128], index: 3, kind: input, shape index: {}]
  %s4 = inlined_call_operand.hbm [shape: f32[16,32], index: 4, kind: input, shape index: {}]
  %s5 = inlined_call_operand.hbm [shape: f32[16,32], index: 5, kind: input, shape index: {}]
  %s6 = inlined_call_operand.hbm [shape: bf16[8,16,32], index: 6, kind: output, shape index: {0}]
  %s7 = inlined_call_operand.hbm [shape: f32[16,32], index: 7, kind: output, shape index: {1}]
  %s8 = inlined_call_operand.hbm [shape: f32[16,32], index: 8, kind: output, shape index: {2}]
  %9 = xla_tuple %s6, %s7, %s8
  %s10 = sld [smem:[#allocation0]]
  $region70: #{tpu_custom_call.1} parent=0
    _
  %s12 = ssub.s32 1, %s10
  %s13 = scalar_select 0, %s12, %s10
  $region1: #{tpu_custom_call.1} parent=0
    #allocation8 [shape = 'u8[32768]{0}', space=vmem, size = 0x8000, scoped, tag = 'input window, operand 0, single buffered']
    #allocation9 [shape = 's32[1]{0}', space=sflag, size = 0x4, scoped, tag = 'scoped memory for tpu_custom_call.1']
    #allocation10 [shape = 's32[1]{0}', space=sflag, size = 0x4, scoped, tag = 'scoped memory for tpu_custom_call.1']
    #allocation11 [shape = 'u8[512]{0}', space=vmem, size = 0x400, scoped, tag = 'input window, operand 3, single buffered']
    #allocation12 [shape = 's32[1]{0}', space=sflag, size = 0x4, scoped, tag = 'scoped memory for tpu_custom_call.1']
    #allocation13 [shape = 'u8[8192]{0}', space=vmem, size = 0x2000, scoped, tag = 'input window, operand 4, single buffered']
    #allocation14 [shape = 'u8[8192]{0}', space=vmem, size = 0x2000, scoped, tag = 'input window, operand 5, single buffered']
    #allocation15 [shape = 's32[1]{0}', space=sflag, size = 0x4, scoped, tag = 'scoped memory for tpu_custom_call.1']
    #allocation16 [shape = 'u8[32768]{0}', space=vmem, size = 0x8000, scoped, tag = 'output window, operand 0, single buffered']
    #allocation17 [shape = 'u8[8192]{0}', space=vmem, size = 0x2000, scoped, tag = 'output window, operand 1, single buffered']
    #allocation18 [shape = 's32[1]{0}', space=sflag, size = 0x4, scoped, tag = 'scoped memory for tpu_custom_call.1']
    #allocation19 [shape = 'u8[8192]{0}', space=vmem, size = 0x2000, scoped, tag = 'output window, operand 2, single buffered']
    %14 = vsyncpa [#allocation9], 0
    %15 = vsyncpa [#allocation12], 0
    %16 = vsyncpa [#allocation15], 0
    %17 = vsyncpa [#allocation10], 0
    %18 = vsyncpa [#allocation18], 0
    // Predicated region
    $region2: #{tpu_custom_call.1} parent=1 // pred_check
      _
    $region3: #{tpu_custom_call.1} parent=1 // pred_check_branch
      %20 = sbr.rel (0) target = $region5
    $region4: #{tpu_custom_call.1} parent=1 // pred_region
      %s22 = ssub.s32 1024, 1024
      %23 = vsyncadd [#allocation9], %s22
      %s24 = sshll.u32 [#allocation8], 4
      %s25 = int_to_ptr.vmem [resolvable:$true] %s24
      %30 = dma.hbm_to_vmem [thread:$0]  %s0, 1024, %s25, [#allocation9], 64, 64, 4
    $region5: #{tpu_custom_call.1} parent=1 // pred_fallthru
      _
    // Predicated region
    $region6: #{tpu_custom_call.1} parent=1 // pred_check
      _
    $region7: #{tpu_custom_call.1} parent=1 // pred_check_branch
      %32 = sbr.rel (0) target = $region9
    $region8: #{tpu_custom_call.1} parent=1 // pred_region
      %s34 = ssub.s32 16, 16
      %35 = vsyncadd [#allocation12], %s34
      %s37 = sshll.u32 [#allocation11], 4
      %s38 = int_to_ptr.vmem [resolvable:$true] %s37
      %40 = dma.hbm_to_vmem [thread:$0]  %s3, 16, %s38, [#allocation12]
    $region9: #{tpu_custom_call.1} parent=1 // pred_fallthru
      _
    // Predicated region
    $region10: #{tpu_custom_call.1} parent=1 // pred_check
      _
    $region11: #{tpu_custom_call.1} parent=1 // pred_check_branch
      %42 = sbr.rel (0) target = $region13
    $region12: #{tpu_custom_call.1} parent=1 // pred_region
      %s44 = ssub.s32 256, 256
      %45 = vsyncadd [#allocation12], %s44
      %s46 = sshll.u32 [#allocation13], 4
      %s47 = int_to_ptr.vmem [resolvable:$true] %s46
      %52 = dma.hbm_to_vmem [thread:$0]  %s4, 256, %s47, [#allocation12], 128, 128, 8
    $region13: #{tpu_custom_call.1} parent=1 // pred_fallthru
      _
    // Predicated region
    $region14: #{tpu_custom_call.1} parent=1 // pred_check
      _
    $region15: #{tpu_custom_call.1} parent=1 // pred_check_branch
      %54 = sbr.rel (0) target = $region17
    $region16: #{tpu_custom_call.1} parent=1 // pred_region
      %s56 = ssub.s32 256, 256
      %57 = vsyncadd [#allocation15], %s56
      %s58 = sshll.u32 [#allocation14], 4
      %s59 = int_to_ptr.vmem [resolvable:$true] %s58
      %64 = dma.hbm_to_vmem [thread:$0]  %s5, 256, %s59, [#allocation15], 128, 128, 8
    $region17: #{tpu_custom_call.1} parent=1 // pred_fallthru
      _
    // Predicated region
    $region18: #{tpu_custom_call.1} parent=1 // pred_check
      _
    $region19: #{tpu_custom_call.1} parent=1 // pred_check_branch
      %66 = sbr.rel (0) target = $region21
    $region20: #{tpu_custom_call.1} parent=1 // pred_region
      %67 = dma.done [#allocation9], 1024
    $region21: #{tpu_custom_call.1} parent=1 // pred_fallthru
      _
    // Predicated region
    $region22: #{tpu_custom_call.1} parent=1 // pred_check
      _
    $region23: #{tpu_custom_call.1} parent=1 // pred_check_branch
      %69 = sbr.rel (0) target = $region25
    $region24: #{tpu_custom_call.1} parent=1 // pred_region
      %70 = dma.done [#allocation12], 16
    $region25: #{tpu_custom_call.1} parent=1 // pred_fallthru
      _
    // Predicated region
    $region26: #{tpu_custom_call.1} parent=1 // pred_check
      _
    $region27: #{tpu_custom_call.1} parent=1 // pred_check_branch
      %72 = sbr.rel (0) target = $region29
    $region28: #{tpu_custom_call.1} parent=1 // pred_region
      %73 = dma.done [#allocation12], 256
    $region29: #{tpu_custom_call.1} parent=1 // pred_fallthru
      _
    // Predicated region
    $region30: #{tpu_custom_call.1} parent=1 // pred_check
      _
    $region31: #{tpu_custom_call.1} parent=1 // pred_check_branch
      %75 = sbr.rel (0) target = $region33
    $region32: #{tpu_custom_call.1} parent=1 // pred_region
      %76 = dma.done [#allocation15], 256
    $region33: #{tpu_custom_call.1} parent=1 // pred_fallthru
      _
    %p78 = scmp.eq.s32.totalorder 0, 0
    // Predicated region
    $region34: #{tpu_custom_call.1} parent=1 // pred_check
      %p79 = pneg %p78
    $region35: #{tpu_custom_call.1} parent=1 // pred_check_branch
      %81 = sbr.rel (%p79) target = $region37
    $region36: #{tpu_custom_call.1} parent=1 // pred_region
      // Predicated region
      $region38: #{tpu_custom_call.1} parent=36 // pred_check
        _
      $region39: #{tpu_custom_call.1} parent=36 // pred_check_branch
        %83 = sbr.rel target = $region41
      $region40: #{tpu_custom_call.1} parent=36 // pred_region
        %84 = sst [smem:[#allocation22]] [#allocation21]
        %85 = sst [smem:[#allocation23]] [#allocation20]
      $region41: #{tpu_custom_call.1} parent=36 // pred_fallthru
        _
      %87 = shalt.err (0)
      %s89 = sshll.u32 [#allocation2], 4
      %s90 = int_to_ptr.vmem [resolvable:$true] %s89
      %92 = dma.hbm_to_vmem [thread:$0]  %s1, 256, %s90, [#allocation7]
      %s93 = scalar_lea.sflag [#allocation7], 1
      // Predicated region
      $region42: #{tpu_custom_call.1} parent=36 // pred_check
        _
      $region43: #{tpu_custom_call.1} parent=36 // pred_check_branch
        %95 = sbr.rel target = $region45
      $region44: #{tpu_custom_call.1} parent=36 // pred_region
        %96 = sst [smem:[#allocation22]] [#allocation25]
        %97 = sst [smem:[#allocation23]] [#allocation24]
      $region45: #{tpu_custom_call.1} parent=36 // pred_fallthru
        _
      %99 = shalt.err (0)
      %s101 = sshll.u32 [#allocation3], 4
      %s102 = int_to_ptr.vmem [resolvable:$true] %s101
      %104 = dma.hbm_to_vmem [thread:$0]  %s2, 256, %s102, %s93
      %v105 = vld [vmem:[#allocation13] sm:$0xff]
      %v106 = vld [vmem:[#allocation13 + $0x8] sm:$0xff]
      %v107 = vpack.c.bf16 %v106, %v105
      %vm108 = vcmask 261120
      %109 = vst.msk [vmem:[#allocation5] sm:$0xff] %vm108, %v107
      %v110 = vld [vmem:[#allocation14] sm:$0xff]
      %v111 = vld [vmem:[#allocation14 + $0x8] sm:$0xff]
      %112 = vst.msk [vmem:[#allocation6] sm:$0xff] %vm108, %v110
      %113 = vst.msk [vmem:[#allocation6 + $0x8] sm:$0xff] %vm108, %v111
      %s114 = smul.u32 4, 4
      %s115 = smul.u32 %s114, 1
      %s116 = sshll.u32 %s115, 4
      %117 = dma.done [#allocation7], %s116
      %s118 = sshll.u32 %s115, 4
      %119 = dma.done %s93, %s118
    $region37: #{tpu_custom_call.1} parent=1 // pred_fallthru
      _
    %v120 = vld [vmem:[#allocation8] sm:$0xf]
    %v121 = vld [vmem:[#allocation8 + $0x4] sm:$0xf]
    %v122 = vld [vmem:[#allocation8 + $0x8] sm:$0xf]
    %v123 = vld [vmem:[#allocation8 + $0xc] sm:$0xf]
    %v124 = vld [vmem:[#allocation8 + $0x10] sm:$0xf]
    %v125 = vld [vmem:[#allocation8 + $0x14] sm:$0xf]
    %v126 = vld [vmem:[#allocation8 + $0x18] sm:$0xf]
    %v127 = vld [vmem:[#allocation8 + $0x1c] sm:$0xf]
    %v128 = vld [vmem:[#allocation8 + $0x20] sm:$0xf]
    %v129 = vld [vmem:[#allocation8 + $0x24] sm:$0xf]
    %v130 = vld [vmem:[#allocation8 + $0x28] sm:$0xf]
    %v131 = vld [vmem:[#allocation8 + $0x2c] sm:$0xf]
    %v132 = vld [vmem:[#allocation8 + $0x30] sm:$0xf]
    %v133 = vld [vmem:[#allocation8 + $0x34] sm:$0xf]
    %v134 = vld [vmem:[#allocation8 + $0x38] sm:$0xf]
    %v135 = vld [vmem:[#allocation8 + $0x3c] sm:$0xf]
    %v136 = vld [vmem:[#allocation2] sm:$0xff]
    %v137 = vld [vmem:[#allocation2 + $0x8] sm:$0xff]
    %v138 = vld [vmem:[#allocation11] sm:$0x1]
    %v140 = vlaneseq
    %v141 = vshrl.u32 %v140, 7
    %v142 = vsub.s32 0, %v141
    %v143 = vrot.slane %v138, %v142
    %v161 = vunpack.c.l.b16 %v120
    %v162 = vunpack.c.l.b16 %v121
    %v163 = vunpack.c.l.b16 %v122
    %v164 = vunpack.c.l.b16 %v123
    %v165 = vunpack.c.l.b16 %v124
    %v166 = vunpack.c.l.b16 %v125
    %v167 = vunpack.c.l.b16 %v126
    %v168 = vunpack.c.l.b16 %v127
    %v169 = vunpack.c.l.b16 %v128
    %v170 = vunpack.c.l.b16 %v129
    %v171 = vunpack.c.l.b16 %v130
    %v172 = vunpack.c.l.b16 %v131
    %v173 = vunpack.c.l.b16 %v132
    %v174 = vunpack.c.l.b16 %v133
    %v175 = vunpack.c.l.b16 %v134
    %v176 = vunpack.c.l.b16 %v135
    %v177 = vpack.c.b16 %v162, %v161
    %v178 = vpack.c.b16 %v164, %v163
    %v179 = vpack.c.b16 %v166, %v165
    %v180 = vpack.c.b16 %v168, %v167
    %v181 = vpack.c.b16 %v170, %v169
    %v182 = vpack.c.b16 %v172, %v171
    %v183 = vpack.c.b16 %v174, %v173
    %v184 = vpack.c.b16 %v176, %v175
    %vm185 = vcmask 261120
    %v187 = vsel %vm185, %v177, 0
    %v190 = vsel %vm185, %v178, 0
    %v193 = vsel %vm185, %v179, 0
    %v196 = vsel %vm185, %v180, 0
    %v199 = vsel %vm185, %v181, 0
    %v202 = vsel %vm185, %v182, 0
    %v205 = vsel %vm185, %v183, 0
    %v208 = vsel %vm185, %v184, 0
    %210 = vmatprep.subr.bf16.mxu0 0
    %211 = vmatpush1.bf16.msra.mxu0 %v136
    %212 = vmatprep.subr.bf16.mxu0 0
    %213 = vmatpush1.bf16.msra.mxu0 %v137
    %214 = vmatprep.subr.bf16.mxu0 0
    %215 = vmatpush1.bf16.msra.mxu0 0
    %216 = vmatprep.subr.bf16.mxu0 0
    %217 = vmatpush1.bf16.msra.mxu0 0
    %218 = vmatprep.subr.bf16.mxu0 0
    %219 = vmatpush1.bf16.msra.mxu0 0
    %220 = vmatprep.subr.bf16.mxu0 0
    %221 = vmatpush1.bf16.msra.mxu0 0
    %222 = vmatprep.subr.bf16.mxu0 0
    %223 = vmatpush1.bf16.msra.mxu0 0
    %224 = vmatprep.subr.bf16.mxu0 0
    %225 = vmatpush1.bf16.msra.mxu0 0
    %226 = vmatprep.subr.bf16.mxu0 0
    %227 = vmatpush1.bf16.msra.mxu0 0
    %228 = vmatprep.subr.bf16.mxu0 0
    %229 = vmatpush1.bf16.msra.mxu0 0
    %230 = vmatprep.subr.bf16.mxu0 0
    %231 = vmatpush1.bf16.msra.mxu0 0
    %232 = vmatprep.subr.bf16.mxu0 0
    %233 = vmatpush1.bf16.msra.mxu0 0
    %234 = vmatprep.subr.bf16.mxu0 0
    %235 = vmatpush1.bf16.msra.mxu0 0
    %236 = vmatprep.subr.bf16.mxu0 0
    %237 = vmatpush1.bf16.msra.mxu0 0
    %238 = vmatprep.subr.bf16.mxu0 0
    %239 = vmatpush1.bf16.msra.mxu0 0
    %240 = vmatprep.subr.bf16.mxu0 0
    %241 = vmatpush1.bf16.msra.mxu0 0
    %242 = vmatprep.mubr.bf16.mxu0 0
    %243 = vmatmul.mubr.bf16.gmra.mrb[0].mxu0 %v187
    %v244 = vpop.f32.mrb[0].mxu0
    %v245 = vadd.f32 %v143, %v244
    %v246 = vpop.f32.mrb[0].mxu0
    %v247 = vpop.f32.mrb[0].mxu0
    %v248 = vadd.f32 %v143, %v247
    %v249 = vpop.f32.mrb[0].mxu0
    %250 = vmatprep.mubr.bf16.mxu0 0
    %251 = vmatmul.mubr.bf16.gmra.mrb[0].mxu0 %v190
    %v252 = vpop.f32.mrb[0].mxu0
    %v253 = vadd.f32 %v143, %v252
    %v254 = vpop.f32.mrb[0].mxu0
    %v255 = vpop.f32.mrb[0].mxu0
    %v256 = vadd.f32 %v143, %v255
    %v257 = vpop.f32.mrb[0].mxu0
    %258 = vmatprep.mubr.bf16.mxu0 0
    %259 = vmatmul.mubr.bf16.gmra.mrb[0].mxu0 %v193
    %v260 = vpop.f32.mrb[0].mxu0
    %v261 = vadd.f32 %v143, %v260
    %v262 = vpop.f32.mrb[0].mxu0
    %v263 = vpop.f32.mrb[0].mxu0
    %v264 = vadd.f32 %v143, %v263
    %v265 = vpop.f32.mrb[0].mxu0
    %266 = vmatprep.mubr.bf16.mxu0 0
    %267 = vmatmul.mubr.bf16.gmra.mrb[0].mxu0 %v196
    %v268 = vpop.f32.mrb[0].mxu0
    %v269 = vadd.f32 %v143, %v268
    %v270 = vpop.f32.mrb[0].mxu0
    %v271 = vpop.f32.mrb[0].mxu0
    %v272 = vadd.f32 %v143, %v271
    %v273 = vpop.f32.mrb[0].mxu0
    %274 = vmatprep.mubr.bf16.mxu0 0
    %275 = vmatmul.mubr.bf16.gmra.mrb[0].mxu0 %v199
    %v276 = vpop.f32.mrb[0].mxu0
    %v277 = vadd.f32 %v143, %v276
    %v278 = vpop.f32.mrb[0].mxu0
    %v279 = vpop.f32.mrb[0].mxu0
    %v280 = vadd.f32 %v143, %v279
    %v281 = vpop.f32.mrb[0].mxu0
    %282 = vmatprep.mubr.bf16.mxu0 0
    %283 = vmatmul.mubr.bf16.gmra.mrb[0].mxu0 %v202
    %v284 = vpop.f32.mrb[0].mxu0
    %v285 = vadd.f32 %v143, %v284
    %v286 = vpop.f32.mrb[0].mxu0
    %v287 = vpop.f32.mrb[0].mxu0
    %v288 = vadd.f32 %v143, %v287
    %v289 = vpop.f32.mrb[0].mxu0
    %290 = vmatprep.mubr.bf16.mxu0 0
    %291 = vmatmul.mubr.bf16.gmra.mrb[0].mxu0 %v205
    %v292 = vpop.f32.mrb[0].mxu0
    %v293 = vadd.f32 %v143, %v292
    %v294 = vpop.f32.mrb[0].mxu0
    %v295 = vpop.f32.mrb[0].mxu0
    %v296 = vadd.f32 %v143, %v295
    %v297 = vpop.f32.mrb[0].mxu0
    %298 = vmatprep.mubr.bf16.mxu0 0
    %299 = vmatmul.mubr.bf16.gmra.mrb[0].mxu0 %v208
    %v300 = vpop.f32.mrb[0].mxu0
    %v301 = vadd.f32 %v143, %v300
    %v302 = vpop.f32.mrb[0].mxu0
    %v303 = vpop.f32.mrb[0].mxu0
    %v304 = vadd.f32 %v143, %v303
    %v305 = vpop.f32.mrb[0].mxu0
    %306 = vdwg.mxu0
    %307 = vst [vmem:[#allocation4] sm:$0xff] %v245
    %308 = vst [vmem:[#allocation4 + $0x8] sm:$0xff] %v248
    %309 = vst [vmem:[#allocation4 + $0x10] sm:$0xff] %v253
    %310 = vst [vmem:[#allocation4 + $0x18] sm:$0xff] %v256
    %311 = vst [vmem:[#allocation4 + $0x20] sm:$0xff] %v261
    %312 = vst [vmem:[#allocation4 + $0x28] sm:$0xff] %v264
    %313 = vst [vmem:[#allocation4 + $0x30] sm:$0xff] %v269
    %314 = vst [vmem:[#allocation4 + $0x38] sm:$0xff] %v272
    %315 = vst [vmem:[#allocation4 + $0x40] sm:$0xff] %v277
    %316 = vst [vmem:[#allocation4 + $0x48] sm:$0xff] %v280
    %317 = vst [vmem:[#allocation4 + $0x50] sm:$0xff] %v285
    %318 = vst [vmem:[#allocation4 + $0x58] sm:$0xff] %v288
    %319 = vst [vmem:[#allocation4 + $0x60] sm:$0xff] %v293
    %320 = vst [vmem:[#allocation4 + $0x68] sm:$0xff] %v296
    %321 = vst [vmem:[#allocation4 + $0x70] sm:$0xff] %v301
    %322 = vst [vmem:[#allocation4 + $0x78] sm:$0xff] %v304
    %v323 = vld [vmem:[#allocation4] sm:$0xff]
    %v324 = vld [vmem:[#allocation4 + $0x8] sm:$0xff]
    %v325 = vld [vmem:[#allocation5] sm:$0xff]
    %v326 = vld [vmem:[#allocation3] sm:$0xff]
    %v327 = vld [vmem:[#allocation3 + $0x8] sm:$0xff]
    %v329 = vsel %vm185, %v325, 0
    %331 = vmatprep.subr.bf16.mxu0 0
    %332 = vmatpush1.bf16.msra.mxu0 %v326
    %333 = vmatprep.subr.bf16.mxu0 0
    %334 = vmatpush1.bf16.msra.mxu0 %v327
    %335 = vmatprep.subr.bf16.mxu0 0
    %336 = vmatpush1.bf16.msra.mxu0 0
    %337 = vmatprep.subr.bf16.mxu0 0
    %338 = vmatpush1.bf16.msra.mxu0 0
    %339 = vmatprep.subr.bf16.mxu0 0
    %340 = vmatpush1.bf16.msra.mxu0 0
    %341 = vmatprep.subr.bf16.mxu0 0
    %342 = vmatpush1.bf16.msra.mxu0 0
    %343 = vmatprep.subr.bf16.mxu0 0
    %344 = vmatpush1.bf16.msra.mxu0 0
    %345 = vmatprep.subr.bf16.mxu0 0
    %346 = vmatpush1.bf16.msra.mxu0 0
    %347 = vmatprep.subr.bf16.mxu0 0
    %348 = vmatpush1.bf16.msra.mxu0 0
    %349 = vmatprep.subr.bf16.mxu0 0
    %350 = vmatpush1.bf16.msra.mxu0 0
    %351 = vmatprep.subr.bf16.mxu0 0
    %352 = vmatpush1.bf16.msra.mxu0 0
    %353 = vmatprep.subr.bf16.mxu0 0
    %354 = vmatpush1.bf16.msra.mxu0 0
    %355 = vmatprep.subr.bf16.mxu0 0
    %356 = vmatpush1.bf16.msra.mxu0 0
    %357 = vmatprep.subr.bf16.mxu0 0
    %358 = vmatpush1.bf16.msra.mxu0 0
    %359 = vmatprep.subr.bf16.mxu0 0
    %360 = vmatpush1.bf16.msra.mxu0 0
    %361 = vmatprep.subr.bf16.mxu0 0
    %362 = vmatpush1.bf16.msra.mxu0 0
    %363 = vmatprep.mubr.bf16.mxu0 0
    %364 = vmatmul.mubr.bf16.gmra.mrb[0].mxu0 %v329
    %v365 = vpop.f32.mrb[0].mxu0
    %v366 = vadd.f32 0.0, %v365
    %v367 = vpop.f32.mrb[0].mxu0
    %v368 = vpop.f32.mrb[0].mxu0
    %v369 = vadd.f32 0.0, %v368
    %v370 = vpop.f32.mrb[0].mxu0
    %371 = vdwg.mxu0
    %v372 = vadd.f32 %v323, %v366
    %v373 = vadd.f32 %v324, %v369
    %v374 = vxor.u32 %v372, 2147483648
    %v375 = vxor.u32 %v373, 2147483648
    %v376 = vmul.f32 %v374, 1.442695
    %v377 = vpow.pop %v376
    %v378 = vmul.f32 %v375, 1.442695
    %v379 = vpow.pop %v378
    %v380 = vadd.f32 %v377, 1.0
    %v381 = vadd.f32 %v379, 1.0
    %v382 = vrcp.pop %v380
    %v383 = vmul.f32 1.0, %v382
    %v384 = vrcp.pop %v381
    %v385 = vmul.f32 1.0, %v384
    %v386 = vtanh.pop %v372
    %v387 = vtanh.pop %v373
    %v388 = vld [vmem:[#allocation6] sm:$0xff]
    %v389 = vld [vmem:[#allocation6 + $0x8] sm:$0xff]
    %392 = vrot.lane.b32.xlu0 %v388, 32
    %v393 = vpop.permute.xlu0 %392
    %394 = vrot.lane.b32.xlu0 %v389, 32
    %v395 = vpop.permute.xlu0 %394
    %v398 = vmul.f32 %v383, %v393
    %v399 = vmul.f32 %v385, %v395
    %402 = vrot.lane.b32.xlu0 %v386, 32
    %v403 = vpop.permute.xlu0 %402
    %404 = vrot.lane.b32.xlu0 %v387, 32
    %v405 = vpop.permute.xlu0 %404
    %v408 = vmul.f32 %v383, %v403
    %v409 = vmul.f32 %v385, %v405
    %412 = vrot.lane.b32.xlu0 %v408, 32
    %v413 = vpop.permute.xlu0 %412
    %414 = vrot.lane.b32.xlu0 %v409, 32
    %v415 = vpop.permute.xlu0 %414
    %v418 = vadd.f32 %v398, %v413
    %v419 = vadd.f32 %v399, %v415
    %v420 = vtanh.pop %v418
    %v421 = vtanh.pop %v419
    %424 = vrot.lane.b32.xlu0 %v420, 32
    %v425 = vpop.permute.xlu0 %424
    %426 = vrot.lane.b32.xlu0 %v421, 32
    %v427 = vpop.permute.xlu0 %426
    %v430 = vmul.f32 %v383, %v425
    %v431 = vmul.f32 %v385, %v427
    %v432 = vpack.c.bf16 %v431, %v430
    %435 = vrot.lane.b32.xlu0 %v418, 96
    %v436 = vpop.permute.xlu0 %435
    %437 = vrot.lane.b32.xlu0 %v419, 96
    %v438 = vpop.permute.xlu0 %437
    %441 = vst.msk [vmem:[#allocation6] sm:$0xff] %vm185, %v436
    %442 = vst.msk [vmem:[#allocation6 + $0x8] sm:$0xff] %vm185, %v438
    %444 = vrot.lane.b32.xlu0 %v432, 64
    %v445 = vpop.permute.xlu0 %444
    %447 = vst.msk [vmem:[#allocation5] sm:$0xff] %vm185, %v445
    %v448 = vunpack.c.l.b16 %v432
    %v449 = vunpack.c.h.b16 %v432
    %v450 = vpack.c.b16 %v448, %v448
    %v451 = vpack.c.b16 %v449, %v449
    %452 = vrot.lane.b32.xlu0 %v450, 64
    %v453 = vpop.permute.xlu0 %452
    %454 = vrot.lane.b32.xlu0 %v451, 64
    %v455 = vpop.permute.xlu0 %454
    %vm458 = vcmask 257024
    %459 = vst.msk [vmem:[#allocation16] sm:$0xf] %vm458, %v453
    %460 = vst.msk [vmem:[#allocation16 + $0x4] sm:$0xf] %vm458, %v455
    %s461 = scalar_lea.vmem [#allocation4], 16
    %v462 = vld [vmem:[%s461] sm:$0xff]
    %v463 = vld [vmem:[%s461 + $0x8] sm:$0xff]
    %v464 = vld [vmem:[#allocation5] sm:$0xff]
    %v465 = vld [vmem:[#allocation3] sm:$0xff]
    %v466 = vld [vmem:[#allocation3 + $0x8] sm:$0xff]
    %v468 = vsel %vm185, %v464, 0
    %470 = vmatprep.subr.bf16.mxu0 0
    %471 = vmatpush1.bf16.msra.mxu0 %v465
    %472 = vmatprep.subr.bf16.mxu0 0
    %473 = vmatpush1.bf16.msra.mxu0 %v466
    %474 = vmatprep.subr.bf16.mxu0 0
    %475 = vmatpush1.bf16.msra.mxu0 0
    %476 = vmatprep.subr.bf16.mxu0 0
    %477 = vmatpush1.bf16.msra.mxu0 0
    %478 = vmatprep.subr.bf16.mxu0 0
    %479 = vmatpush1.bf16.msra.mxu0 0
    %480 = vmatprep.subr.bf16.mxu0 0
    %481 = vmatpush1.bf16.msra.mxu0 0
    %482 = vmatprep.subr.bf16.mxu0 0
    %483 = vmatpush1.bf16.msra.mxu0 0
    %484 = vmatprep.subr.bf16.mxu0 0
    %485 = vmatpush1.bf16.msra.mxu0 0
    %486 = vmatprep.subr.bf16.mxu0 0
    %487 = vmatpush1.bf16.msra.mxu0 0
    %488 = vmatprep.subr.bf16.mxu0 0
    %489 = vmatpush1.bf16.msra.mxu0 0
    %490 = vmatprep.subr.bf16.mxu0 0
    %491 = vmatpush1.bf16.msra.mxu0 0
    %492 = vmatprep.subr.bf16.mxu0 0
    %493 = vmatpush1.bf16.msra.mxu0 0
    %494 = vmatprep.subr.bf16.mxu0 0
    %495 = vmatpush1.bf16.msra.mxu0 0
    %496 = vmatprep.subr.bf16.mxu0 0
    %497 = vmatpush1.bf16.msra.mxu0 0
    %498 = vmatprep.subr.bf16.mxu0 0
    %499 = vmatpush1.bf16.msra.mxu0 0
    %500 = vmatprep.subr.bf16.mxu0 0
    %501 = vmatpush1.bf16.msra.mxu0 0
    %502 = vmatprep.mubr.bf16.mxu0 0
    %503 = vmatmul.mubr.bf16.gmra.mrb[0].mxu0 %v468
    %v504 = vpop.f32.mrb[0].mxu0
    %v505 = vadd.f32 0.0, %v504
    %v506 = vpop.f32.mrb[0].mxu0
    %v507 = vpop.f32.mrb[0].mxu0
    %v508 = vadd.f32 0.0, %v507
    %v509 = vpop.f32.mrb[0].mxu0
    %510 = vdwg.mxu0
    %v511 = vadd.f32 %v462, %v505
    %v512 = vadd.f32 %v463, %v508
    %v513 = vxor.u32 %v511, 2147483648
    %v514 = vxor.u32 %v512, 2147483648
    %v515 = vmul.f32 %v513, 1.442695
    %v516 = vpow.pop %v515
    %v517 = vmul.f32 %v514, 1.442695
    %v518 = vpow.pop %v517
    %v519 = vadd.f32 %v516, 1.0
    %v520 = vadd.f32 %v518, 1.0
    %v521 = vrcp.pop %v519
    %v522 = vmul.f32 1.0, %v521
    %v523 = vrcp.pop %v520
    %v524 = vmul.f32 1.0, %v523
    %v525 = vtanh.pop %v511
    %v526 = vtanh.pop %v512
    %v527 = vld [vmem:[#allocation6] sm:$0xff]
    %v528 = vld [vmem:[#allocation6 + $0x8] sm:$0xff]
    %531 = vrot.lane.b32.xlu0 %v527, 32
    %v532 = vpop.permute.xlu0 %531
    %533 = vrot.lane.b32.xlu0 %v528, 32
    %v534 = vpop.permute.xlu0 %533
    %v537 = vmul.f32 %v522, %v532
    %v538 = vmul.f32 %v524, %v534
    %541 = vrot.lane.b32.xlu0 %v525, 32
    %v542 = vpop.permute.xlu0 %541
    %543 = vrot.lane.b32.xlu0 %v526, 32
    %v544 = vpop.permute.xlu0 %543
    %v547 = vmul.f32 %v522, %v542
    %v548 = vmul.f32 %v524, %v544
    %551 = vrot.lane.b32.xlu0 %v547, 32
    %v552 = vpop.permute.xlu0 %551
    %553 = vrot.lane.b32.xlu0 %v548, 32
    %v554 = vpop.permute.xlu0 %553
    %v557 = vadd.f32 %v537, %v552
    %v558 = vadd.f32 %v538, %v554
    %v559 = vtanh.pop %v557
    %v560 = vtanh.pop %v558
    %563 = vrot.lane.b32.xlu0 %v559, 32
    %v564 = vpop.permute.xlu0 %563
    %565 = vrot.lane.b32.xlu0 %v560, 32
    %v566 = vpop.permute.xlu0 %565
    %v569 = vmul.f32 %v522, %v564
    %v570 = vmul.f32 %v524, %v566
    %v571 = vpack.c.bf16 %v570, %v569
    %574 = vrot.lane.b32.xlu0 %v557, 96
    %v575 = vpop.permute.xlu0 %574
    %576 = vrot.lane.b32.xlu0 %v558, 96
    %v577 = vpop.permute.xlu0 %576
    %580 = vst.msk [vmem:[#allocation6] sm:$0xff] %vm185, %v575
    %581 = vst.msk [vmem:[#allocation6 + $0x8] sm:$0xff] %vm185, %v577
    %583 = vrot.lane.b32.xlu0 %v571, 64
    %v584 = vpop.permute.xlu0 %583
    %586 = vst.msk [vmem:[#allocation5] sm:$0xff] %vm185, %v584
    %v587 = vunpack.c.l.b16 %v571
    %v588 = vunpack.c.h.b16 %v571
    %v589 = vpack.c.b16 %v587, %v587
    %v590 = vpack.c.b16 %v588, %v588
    %591 = vrot.lane.b32.xlu0 %v589, 64
    %v592 = vpop.permute.xlu0 %591
    %593 = vrot.lane.b32.xlu0 %v590, 64
    %v594 = vpop.permute.xlu0 %593
    %s597 = scalar_lea.vmem [#allocation16], 8
    %598 = vst.msk [vmem:[%s597] sm:$0xf] %vm458, %v592
    %599 = vst.msk [vmem:[%s597 + $0x4] sm:$0xf] %vm458, %v594
    %s600 = scalar_lea.vmem [#allocation4], 32
    %v601 = vld [vmem:[%s600] sm:$0xff]
    %v602 = vld [vmem:[%s600 + $0x8] sm:$0xff]
    %v603 = vld [vmem:[#allocation5] sm:$0xff]
    %v604 = vld [vmem:[#allocation3] sm:$0xff]
    %v605 = vld [vmem:[#allocation3 + $0x8] sm:$0xff]
    %v607 = vsel %vm185, %v603, 0
    %609 = vmatprep.subr.bf16.mxu0 0
    %610 = vmatpush1.bf16.msra.mxu0 %v604
    %611 = vmatprep.subr.bf16.mxu0 0
    %612 = vmatpush1.bf16.msra.mxu0 %v605
    %613 = vmatprep.subr.bf16.mxu0 0
    %614 = vmatpush1.bf16.msra.mxu0 0
    %615 = vmatprep.subr.bf16.mxu0 0
    %616 = vmatpush1.bf16.msra.mxu0 0
    %617 = vmatprep.subr.bf16.mxu0 0
    %618 = vmatpush1.bf16.msra.mxu0 0
    %619 = vmatprep.subr.bf16.mxu0 0
    %620 = vmatpush1.bf16.msra.mxu0 0
    %621 = vmatprep.subr.bf16.mxu0 0
    %622 = vmatpush1.bf16.msra.mxu0 0
    %623 = vmatprep.subr.bf16.mxu0 0
    %624 = vmatpush1.bf16.msra.mxu0 0
    %625 = vmatprep.subr.bf16.mxu0 0
    %626 = vmatpush1.bf16.msra.mxu0 0
    %627 = vmatprep.subr.bf16.mxu0 0
    %628 = vmatpush1.bf16.msra.mxu0 0
    %629 = vmatprep.subr.bf16.mxu0 0
    %630 = vmatpush1.bf16.msra.mxu0 0
    %631 = vmatprep.subr.bf16.mxu0 0
    %632 = vmatpush1.bf16.msra.mxu0 0
    %633 = vmatprep.subr.bf16.mxu0 0
    %634 = vmatpush1.bf16.msra.mxu0 0
    %635 = vmatprep.subr.bf16.mxu0 0
    %636 = vmatpush1.bf16.msra.mxu0 0
    %637 = vmatprep.subr.bf16.mxu0 0
    %638 = vmatpush1.bf16.msra.mxu0 0
    %639 = vmatprep.subr.bf16.mxu0 0
    %640 = vmatpush1.bf16.msra.mxu0 0
    %641 = vmatprep.mubr.bf16.mxu0 0
    %642 = vmatmul.mubr.bf16.gmra.mrb[0].mxu0 %v607
    %v643 = vpop.f32.mrb[0].mxu0
    %v644 = vadd.f32 0.0, %v643
    %v645 = vpop.f32.mrb[0].mxu0
    %v646 = vpop.f32.mrb[0].mxu0
    %v647 = vadd.f32 0.0, %v646
    %v648 = vpop.f32.mrb[0].mxu0
    %649 = vdwg.mxu0
    %v650 = vadd.f32 %v601, %v644
    %v651 = vadd.f32 %v602, %v647
    %v652 = vxor.u32 %v650, 2147483648
    %v653 = vxor.u32 %v651, 2147483648
    %v654 = vmul.f32 %v652, 1.442695
    %v655 = vpow.pop %v654
    %v656 = vmul.f32 %v653, 1.442695
    %v657 = vpow.pop %v656
    %v658 = vadd.f32 %v655, 1.0
    %v659 = vadd.f32 %v657, 1.0
    %v660 = vrcp.pop %v658
    %v661 = vmul.f32 1.0, %v660
    %v662 = vrcp.pop %v659
    %v663 = vmul.f32 1.0, %v662
    %v664 = vtanh.pop %v650
    %v665 = vtanh.pop %v651
    %v666 = vld [vmem:[#allocation6] sm:$0xff]
    %v667 = vld [vmem:[#allocation6 + $0x8] sm:$0xff]
    %670 = vrot.lane.b32.xlu0 %v666, 32
    %v671 = vpop.permute.xlu0 %670
    %672 = vrot.lane.b32.xlu0 %v667, 32
    %v673 = vpop.permute.xlu0 %672
    %v676 = vmul.f32 %v661, %v671
    %v677 = vmul.f32 %v663, %v673
    %680 = vrot.lane.b32.xlu0 %v664, 32
    %v681 = vpop.permute.xlu0 %680
    %682 = vrot.lane.b32.xlu0 %v665, 32
    %v683 = vpop.permute.xlu0 %682
    %v686 = vmul.f32 %v661, %v681
    %v687 = vmul.f32 %v663, %v683
    %690 = vrot.lane.b32.xlu0 %v686, 32
    %v691 = vpop.permute.xlu0 %690
    %692 = vrot.lane.b32.xlu0 %v687, 32
    %v693 = vpop.permute.xlu0 %692
    %v696 = vadd.f32 %v676, %v691
    %v697 = vadd.f32 %v677, %v693
    %v698 = vtanh.pop %v696
    %v699 = vtanh.pop %v697
    %702 = vrot.lane.b32.xlu0 %v698, 32
    %v703 = vpop.permute.xlu0 %702
    %704 = vrot.lane.b32.xlu0 %v699, 32
    %v705 = vpop.permute.xlu0 %704
    %v708 = vmul.f32 %v661, %v703
    %v709 = vmul.f32 %v663, %v705
    %v710 = vpack.c.bf16 %v709, %v708
    %713 = vrot.lane.b32.xlu0 %v696, 96
    %v714 = vpop.permute.xlu0 %713
    %715 = vrot.lane.b32.xlu0 %v697, 96
    %v716 = vpop.permute.xlu0 %715
    %719 = vst.msk [vmem:[#allocation6] sm:$0xff] %vm185, %v714
    %720 = vst.msk [vmem:[#allocation6 + $0x8] sm:$0xff] %vm185, %v716
    %722 = vrot.lane.b32.xlu0 %v710, 64
    %v723 = vpop.permute.xlu0 %722
    %725 = vst.msk [vmem:[#allocation5] sm:$0xff] %vm185, %v723
    %v726 = vunpack.c.l.b16 %v710
    %v727 = vunpack.c.h.b16 %v710
    %v728 = vpack.c.b16 %v726, %v726
    %v729 = vpack.c.b16 %v727, %v727
    %730 = vrot.lane.b32.xlu0 %v728, 64
    %v731 = vpop.permute.xlu0 %730
    %732 = vrot.lane.b32.xlu0 %v729, 64
    %v733 = vpop.permute.xlu0 %732
    %s736 = scalar_lea.vmem [#allocation16], 16
    %737 = vst.msk [vmem:[%s736] sm:$0xf] %vm458, %v731
    %738 = vst.msk [vmem:[%s736 + $0x4] sm:$0xf] %vm458, %v733
    %s739 = scalar_lea.vmem [#allocation4], 48
    %v740 = vld [vmem:[%s739] sm:$0xff]
    %v741 = vld [vmem:[%s739 + $0x8] sm:$0xff]
    %v742 = vld [vmem:[#allocation5] sm:$0xff]
    %v743 = vld [vmem:[#allocation3] sm:$0xff]
    %v744 = vld [vmem:[#allocation3 + $0x8] sm:$0xff]
    %v746 = vsel %vm185, %v742, 0
    %748 = vmatprep.subr.bf16.mxu0 0
    %749 = vmatpush1.bf16.msra.mxu0 %v743
    %750 = vmatprep.subr.bf16.mxu0 0
    %751 = vmatpush1.bf16.msra.mxu0 %v744
    %752 = vmatprep.subr.bf16.mxu0 0
    %753 = vmatpush1.bf16.msra.mxu0 0
    %754 = vmatprep.subr.bf16.mxu0 0
    %755 = vmatpush1.bf16.msra.mxu0 0
    %756 = vmatprep.subr.bf16.mxu0 0
    %757 = vmatpush1.bf16.msra.mxu0 0
    %758 = vmatprep.subr.bf16.mxu0 0
    %759 = vmatpush1.bf16.msra.mxu0 0
    %760 = vmatprep.subr.bf16.mxu0 0
    %761 = vmatpush1.bf16.msra.mxu0 0
    %762 = vmatprep.subr.bf16.mxu0 0
    %763 = vmatpush1.bf16.msra.mxu0 0
    %764 = vmatprep.subr.bf16.mxu0 0
    %765 = vmatpush1.bf16.msra.mxu0 0
    %766 = vmatprep.subr.bf16.mxu0 0
    %767 = vmatpush1.bf16.msra.mxu0 0
    %768 = vmatprep.subr.bf16.mxu0 0
    %769 = vmatpush1.bf16.msra.mxu0 0
    %770 = vmatprep.subr.bf16.mxu0 0
    %771 = vmatpush1.bf16.msra.mxu0 0
    %772 = vmatprep.subr.bf16.mxu0 0
    %773 = vmatpush1.bf16.msra.mxu0 0
    %774 = vmatprep.subr.bf16.mxu0 0
    %775 = vmatpush1.bf16.msra.mxu0 0
    %776 = vmatprep.subr.bf16.mxu0 0
    %777 = vmatpush1.bf16.msra.mxu0 0
    %778 = vmatprep.subr.bf16.mxu0 0
    %779 = vmatpush1.bf16.msra.mxu0 0
    %780 = vmatprep.mubr.bf16.mxu0 0
    %781 = vmatmul.mubr.bf16.gmra.mrb[0].mxu0 %v746
    %v782 = vpop.f32.mrb[0].mxu0
    %v783 = vadd.f32 0.0, %v782
    %v784 = vpop.f32.mrb[0].mxu0
    %v785 = vpop.f32.mrb[0].mxu0
    %v786 = vadd.f32 0.0, %v785
    %v787 = vpop.f32.mrb[0].mxu0
    %788 = vdwg.mxu0
    %v789 = vadd.f32 %v740, %v783
    %v790 = vadd.f32 %v741, %v786
    %v791 = vxor.u32 %v789, 2147483648
    %v792 = vxor.u32 %v790, 2147483648
    %v793 = vmul.f32 %v791, 1.442695
    %v794 = vpow.pop %v793
    %v795 = vmul.f32 %v792, 1.442695
    %v796 = vpow.pop %v795
    %v797 = vadd.f32 %v794, 1.0
    %v798 = vadd.f32 %v796, 1.0
    %v799 = vrcp.pop %v797
    %v800 = vmul.f32 1.0, %v799
    %v801 = vrcp.pop %v798
    %v802 = vmul.f32 1.0, %v801
    %v803 = vtanh.pop %v789
    %v804 = vtanh.pop %v790
    %v805 = vld [vmem:[#allocation6] sm:$0xff]
    %v806 = vld [vmem:[#allocation6 + $0x8] sm:$0xff]
    %809 = vrot.lane.b32.xlu0 %v805, 32
    %v810 = vpop.permute.xlu0 %809
    %811 = vrot.lane.b32.xlu0 %v806, 32
    %v812 = vpop.permute.xlu0 %811
    %v815 = vmul.f32 %v800, %v810
    %v816 = vmul.f32 %v802, %v812
    %819 = vrot.lane.b32.xlu0 %v803, 32
    %v820 = vpop.permute.xlu0 %819
    %821 = vrot.lane.b32.xlu0 %v804, 32
    %v822 = vpop.permute.xlu0 %821
    %v825 = vmul.f32 %v800, %v820
    %v826 = vmul.f32 %v802, %v822
    %829 = vrot.lane.b32.xlu0 %v825, 32
    %v830 = vpop.permute.xlu0 %829
    %831 = vrot.lane.b32.xlu0 %v826, 32
    %v832 = vpop.permute.xlu0 %831
    %v835 = vadd.f32 %v815, %v830
    %v836 = vadd.f32 %v816, %v832
    %v837 = vtanh.pop %v835
    %v838 = vtanh.pop %v836
    %841 = vrot.lane.b32.xlu0 %v837, 32
    %v842 = vpop.permute.xlu0 %841
    %843 = vrot.lane.b32.xlu0 %v838, 32
    %v844 = vpop.permute.xlu0 %843
    %v847 = vmul.f32 %v800, %v842
    %v848 = vmul.f32 %v802, %v844
    %v849 = vpack.c.bf16 %v848, %v847
    %852 = vrot.lane.b32.xlu0 %v835, 96
    %v853 = vpop.permute.xlu0 %852
    %854 = vrot.lane.b32.xlu0 %v836, 96
    %v855 = vpop.permute.xlu0 %854
    %858 = vst.msk [vmem:[#allocation6] sm:$0xff] %vm185, %v853
    %859 = vst.msk [vmem:[#allocation6 + $0x8] sm:$0xff] %vm185, %v855
    %861 = vrot.lane.b32.xlu0 %v849, 64
    %v862 = vpop.permute.xlu0 %861
    %864 = vst.msk [vmem:[#allocation5] sm:$0xff] %vm185, %v862
    %v865 = vunpack.c.l.b16 %v849
    %v866 = vunpack.c.h.b16 %v849
    %v867 = vpack.c.b16 %v865, %v865
    %v868 = vpack.c.b16 %v866, %v866
    %869 = vrot.lane.b32.xlu0 %v867, 64
    %v870 = vpop.permute.xlu0 %869
    %871 = vrot.lane.b32.xlu0 %v868, 64
    %v872 = vpop.permute.xlu0 %871
    %s875 = scalar_lea.vmem [#allocation16], 24
    %876 = vst.msk [vmem:[%s875] sm:$0xf] %vm458, %v870
    %877 = vst.msk [vmem:[%s875 + $0x4] sm:$0xf] %vm458, %v872
    %s878 = scalar_lea.vmem [#allocation4], 64
    %v879 = vld [vmem:[%s878] sm:$0xff]
    %v880 = vld [vmem:[%s878 + $0x8] sm:$0xff]
    %v881 = vld [vmem:[#allocation5] sm:$0xff]
    %v882 = vld [vmem:[#allocation3] sm:$0xff]
    %v883 = vld [vmem:[#allocation3 + $0x8] sm:$0xff]
    %v885 = vsel %vm185, %v881, 0
    %887 = vmatprep.subr.bf16.mxu0 0
    %888 = vmatpush1.bf16.msra.mxu0 %v882
    %889 = vmatprep.subr.bf16.mxu0 0
    %890 = vmatpush1.bf16.msra.mxu0 %v883
    %891 = vmatprep.subr.bf16.mxu0 0
    %892 = vmatpush1.bf16.msra.mxu0 0
    %893 = vmatprep.subr.bf16.mxu0 0
    %894 = vmatpush1.bf16.msra.mxu0 0
    %895 = vmatprep.subr.bf16.mxu0 0
    %896 = vmatpush1.bf16.msra.mxu0 0
    %897 = vmatprep.subr.bf16.mxu0 0
    %898 = vmatpush1.bf16.msra.mxu0 0
    %899 = vmatprep.subr.bf16.mxu0 0
    %900 = vmatpush1.bf16.msra.mxu0 0
    %901 = vmatprep.subr.bf16.mxu0 0
    %902 = vmatpush1.bf16.msra.mxu0 0
    %903 = vmatprep.subr.bf16.mxu0 0
    %904 = vmatpush1.bf16.msra.mxu0 0
    %905 = vmatprep.subr.bf16.mxu0 0
    %906 = vmatpush1.bf16.msra.mxu0 0
    %907 = vmatprep.subr.bf16.mxu0 0
    %908 = vmatpush1.bf16.msra.mxu0 0
    %909 = vmatprep.subr.bf16.mxu0 0
    %910 = vmatpush1.bf16.msra.mxu0 0
    %911 = vmatprep.subr.bf16.mxu0 0
    %912 = vmatpush1.bf16.msra.mxu0 0
    %913 = vmatprep.subr.bf16.mxu0 0
    %914 = vmatpush1.bf16.msra.mxu0 0
    %915 = vmatprep.subr.bf16.mxu0 0
    %916 = vmatpush1.bf16.msra.mxu0 0
    %917 = vmatprep.subr.bf16.mxu0 0
    %918 = vmatpush1.bf16.msra.mxu0 0
    %919 = vmatprep.mubr.bf16.mxu0 0
    %920 = vmatmul.mubr.bf16.gmra.mrb[0].mxu0 %v885
    %v921 = vpop.f32.mrb[0].mxu0
    %v922 = vadd.f32 0.0, %v921
    %v923 = vpop.f32.mrb[0].mxu0
    %v924 = vpop.f32.mrb[0].mxu0
    %v925 = vadd.f32 0.0, %v924
    %v926 = vpop.f32.mrb[0].mxu0
    %927 = vdwg.mxu0
    %v928 = vadd.f32 %v879, %v922
    %v929 = vadd.f32 %v880, %v925
    %v930 = vxor.u32 %v928, 2147483648
    %v931 = vxor.u32 %v929, 2147483648
    %v932 = vmul.f32 %v930, 1.442695
    %v933 = vpow.pop %v932
    %v934 = vmul.f32 %v931, 1.442695
    %v935 = vpow.pop %v934
    %v936 = vadd.f32 %v933, 1.0
    %v937 = vadd.f32 %v935, 1.0
    %v938 = vrcp.pop %v936
    %v939 = vmul.f32 1.0, %v938
    %v940 = vrcp.pop %v937
    %v941 = vmul.f32 1.0, %v940
    %v942 = vtanh.pop %v928
    %v943 = vtanh.pop %v929
    %v944 = vld [vmem:[#allocation6] sm:$0xff]
    %v945 = vld [vmem:[#allocation6 + $0x8] sm:$0xff]
    %948 = vrot.lane.b32.xlu0 %v944, 32
    %v949 = vpop.permute.xlu0 %948
    %950 = vrot.lane.b32.xlu0 %v945, 32
    %v951 = vpop.permute.xlu0 %950
    %v954 = vmul.f32 %v939, %v949
    %v955 = vmul.f32 %v941, %v951
    %958 = vrot.lane.b32.xlu0 %v942, 32
    %v959 = vpop.permute.xlu0 %958
    %960 = vrot.lane.b32.xlu0 %v943, 32
    %v961 = vpop.permute.xlu0 %960
    %v964 = vmul.f32 %v939, %v959
    %v965 = vmul.f32 %v941, %v961
    %968 = vrot.lane.b32.xlu0 %v964, 32
    %v969 = vpop.permute.xlu0 %968
    %970 = vrot.lane.b32.xlu0 %v965, 32
    %v971 = vpop.permute.xlu0 %970
    %v974 = vadd.f32 %v954, %v969
    %v975 = vadd.f32 %v955, %v971
    %v976 = vtanh.pop %v974
    %v977 = vtanh.pop %v975
    %980 = vrot.lane.b32.xlu0 %v976, 32
    %v981 = vpop.permute.xlu0 %980
    %982 = vrot.lane.b32.xlu0 %v977, 32
    %v983 = vpop.permute.xlu0 %982
    %v986 = vmul.f32 %v939, %v981
    %v987 = vmul.f32 %v941, %v983
    %v988 = vpack.c.bf16 %v987, %v986
    %991 = vrot.lane.b32.xlu0 %v974, 96
    %v992 = vpop.permute.xlu0 %991
    %993 = vrot.lane.b32.xlu0 %v975, 96
    %v994 = vpop.permute.xlu0 %993
    %997 = vst.msk [vmem:[#allocation6] sm:$0xff] %vm185, %v992
    %998 = vst.msk [vmem:[#allocation6 + $0x8] sm:$0xff] %vm185, %v994
    %1000 = vrot.lane.b32.xlu0 %v988, 64
    %v1001 = vpop.permute.xlu0 %1000
    %1003 = vst.msk [vmem:[#allocation5] sm:$0xff] %vm185, %v1001
    %v1004 = vunpack.c.l.b16 %v988
    %v1005 = vunpack.c.h.b16 %v988
    %v1006 = vpack.c.b16 %v1004, %v1004
    %v1007 = vpack.c.b16 %v1005, %v1005
    %1008 = vrot.lane.b32.xlu0 %v1006, 64
    %v1009 = vpop.permute.xlu0 %1008
    %1010 = vrot.lane.b32.xlu0 %v1007, 64
    %v1011 = vpop.permute.xlu0 %1010
    %s1014 = scalar_lea.vmem [#allocation16], 32
    %1015 = vst.msk [vmem:[%s1014] sm:$0xf] %vm458, %v1009
    %1016 = vst.msk [vmem:[%s1014 + $0x4] sm:$0xf] %vm458, %v1011
    %s1017 = scalar_lea.vmem [#allocation4], 80
    %v1018 = vld [vmem:[%s1017] sm:$0xff]
    %v1019 = vld [vmem:[%s1017 + $0x8] sm:$0xff]
    %v1020 = vld [vmem:[#allocation5] sm:$0xff]
    %v1021 = vld [vmem:[#allocation3] sm:$0xff]
    %v1022 = vld [vmem:[#allocation3 + $0x8] sm:$0xff]
    %v1024 = vsel %vm185, %v1020, 0
    %1026 = vmatprep.subr.bf16.mxu0 0
    %1027 = vmatpush1.bf16.msra.mxu0 %v1021
    %1028 = vmatprep.subr.bf16.mxu0 0
    %1029 = vmatpush1.bf16.msra.mxu0 %v1022
    %1030 = vmatprep.subr.bf16.mxu0 0
    %1031 = vmatpush1.bf16.msra.mxu0 0
    %1032 = vmatprep.subr.bf16.mxu0 0
    %1033 = vmatpush1.bf16.msra.mxu0 0
    %1034 = vmatprep.subr.bf16.mxu0 0
    %1035 = vmatpush1.bf16.msra.mxu0 0
    %1036 = vmatprep.subr.bf16.mxu0 0
    %1037 = vmatpush1.bf16.msra.mxu0 0
    %1038 = vmatprep.subr.bf16.mxu0 0
    %1039 = vmatpush1.bf16.msra.mxu0 0
    %1040 = vmatprep.subr.bf16.mxu0 0
    %1041 = vmatpush1.bf16.msra.mxu0 0
    %1042 = vmatprep.subr.bf16.mxu0 0
    %1043 = vmatpush1.bf16.msra.mxu0 0
    %1044 = vmatprep.subr.bf16.mxu0 0
    %1045 = vmatpush1.bf16.msra.mxu0 0
    %1046 = vmatprep.subr.bf16.mxu0 0
    %1047 = vmatpush1.bf16.msra.mxu0 0
    %1048 = vmatprep.subr.bf16.mxu0 0
    %1049 = vmatpush1.bf16.msra.mxu0 0
    %1050 = vmatprep.subr.bf16.mxu0 0
    %1051 = vmatpush1.bf16.msra.mxu0 0
    %1052 = vmatprep.subr.bf16.mxu0 0
    %1053 = vmatpush1.bf16.msra.mxu0 0
    %1054 = vmatprep.subr.bf16.mxu0 0
    %1055 = vmatpush1.bf16.msra.mxu0 0
    %1056 = vmatprep.subr.bf16.mxu0 0
    %1057 = vmatpush1.bf16.msra.mxu0 0
    %1058 = vmatprep.mubr.bf16.mxu0 0
    %1059 = vmatmul.mubr.bf16.gmra.mrb[0].mxu0 %v1024
    %v1060 = vpop.f32.mrb[0].mxu0
    %v1061 = vadd.f32 0.0, %v1060
    %v1062 = vpop.f32.mrb[0].mxu0
    %v1063 = vpop.f32.mrb[0].mxu0
    %v1064 = vadd.f32 0.0, %v1063
    %v1065 = vpop.f32.mrb[0].mxu0
    %1066 = vdwg.mxu0
    %v1067 = vadd.f32 %v1018, %v1061
    %v1068 = vadd.f32 %v1019, %v1064
    %v1069 = vxor.u32 %v1067, 2147483648
    %v1070 = vxor.u32 %v1068, 2147483648
    %v1071 = vmul.f32 %v1069, 1.442695
    %v1072 = vpow.pop %v1071
    %v1073 = vmul.f32 %v1070, 1.442695
    %v1074 = vpow.pop %v1073
    %v1075 = vadd.f32 %v1072, 1.0
    %v1076 = vadd.f32 %v1074, 1.0
    %v1077 = vrcp.pop %v1075
    %v1078 = vmul.f32 1.0, %v1077
    %v1079 = vrcp.pop %v1076
    %v1080 = vmul.f32 1.0, %v1079
    %v1081 = vtanh.pop %v1067
    %v1082 = vtanh.pop %v1068
    %v1083 = vld [vmem:[#allocation6] sm:$0xff]
    %v1084 = vld [vmem:[#allocation6 + $0x8] sm:$0xff]
    %1087 = vrot.lane.b32.xlu0 %v1083, 32
    %v1088 = vpop.permute.xlu0 %1087
    %1089 = vrot.lane.b32.xlu0 %v1084, 32
    %v1090 = vpop.permute.xlu0 %1089
    %v1093 = vmul.f32 %v1078, %v1088
    %v1094 = vmul.f32 %v1080, %v1090
    %1097 = vrot.lane.b32.xlu0 %v1081, 32
    %v1098 = vpop.permute.xlu0 %1097
    %1099 = vrot.lane.b32.xlu0 %v1082, 32
    %v1100 = vpop.permute.xlu0 %1099
    %v1103 = vmul.f32 %v1078, %v1098
    %v1104 = vmul.f32 %v1080, %v1100
    %1107 = vrot.lane.b32.xlu0 %v1103, 32
    %v1108 = vpop.permute.xlu0 %1107
    %1109 = vrot.lane.b32.xlu0 %v1104, 32
    %v1110 = vpop.permute.xlu0 %1109
    %v1113 = vadd.f32 %v1093, %v1108
    %v1114 = vadd.f32 %v1094, %v1110
    %v1115 = vtanh.pop %v1113
    %v1116 = vtanh.pop %v1114
    %1119 = vrot.lane.b32.xlu0 %v1115, 32
    %v1120 = vpop.permute.xlu0 %1119
    %1121 = vrot.lane.b32.xlu0 %v1116, 32
    %v1122 = vpop.permute.xlu0 %1121
    %v1125 = vmul.f32 %v1078, %v1120
    %v1126 = vmul.f32 %v1080, %v1122
    %v1127 = vpack.c.bf16 %v1126, %v1125
    %1130 = vrot.lane.b32.xlu0 %v1113, 96
    %v1131 = vpop.permute.xlu0 %1130
    %1132 = vrot.lane.b32.xlu0 %v1114, 96
    %v1133 = vpop.permute.xlu0 %1132
    %1136 = vst.msk [vmem:[#allocation6] sm:$0xff] %vm185, %v1131
    %1137 = vst.msk [vmem:[#allocation6 + $0x8] sm:$0xff] %vm185, %v1133
    %1139 = vrot.lane.b32.xlu0 %v1127, 64
    %v1140 = vpop.permute.xlu0 %1139
    %1142 = vst.msk [vmem:[#allocation5] sm:$0xff] %vm185, %v1140
    %v1143 = vunpack.c.l.b16 %v1127
    %v1144 = vunpack.c.h.b16 %v1127
    %v1145 = vpack.c.b16 %v1143, %v1143
    %v1146 = vpack.c.b16 %v1144, %v1144
    %1147 = vrot.lane.b32.xlu0 %v1145, 64
    %v1148 = vpop.permute.xlu0 %1147
    %1149 = vrot.lane.b32.xlu0 %v1146, 64
    %v1150 = vpop.permute.xlu0 %1149
    %s1153 = scalar_lea.vmem [#allocation16], 40
    %1154 = vst.msk [vmem:[%s1153] sm:$0xf] %vm458, %v1148
    %1155 = vst.msk [vmem:[%s1153 + $0x4] sm:$0xf] %vm458, %v1150
    %s1156 = scalar_lea.vmem [#allocation4], 96
    %v1157 = vld [vmem:[%s1156] sm:$0xff]
    %v1158 = vld [vmem:[%s1156 + $0x8] sm:$0xff]
    %v1159 = vld [vmem:[#allocation5] sm:$0xff]
    %v1160 = vld [vmem:[#allocation3] sm:$0xff]
    %v1161 = vld [vmem:[#allocation3 + $0x8] sm:$0xff]
    %v1163 = vsel %vm185, %v1159, 0
    %1165 = vmatprep.subr.bf16.mxu0 0
    %1166 = vmatpush1.bf16.msra.mxu0 %v1160
    %1167 = vmatprep.subr.bf16.mxu0 0
    %1168 = vmatpush1.bf16.msra.mxu0 %v1161
    %1169 = vmatprep.subr.bf16.mxu0 0
    %1170 = vmatpush1.bf16.msra.mxu0 0
    %1171 = vmatprep.subr.bf16.mxu0 0
    %1172 = vmatpush1.bf16.msra.mxu0 0
    %1173 = vmatprep.subr.bf16.mxu0 0
    %1174 = vmatpush1.bf16.msra.mxu0 0
    %1175 = vmatprep.subr.bf16.mxu0 0
    %1176 = vmatpush1.bf16.msra.mxu0 0
    %1177 = vmatprep.subr.bf16.mxu0 0
    %1178 = vmatpush1.bf16.msra.mxu0 0
    %1179 = vmatprep.subr.bf16.mxu0 0
    %1180 = vmatpush1.bf16.msra.mxu0 0
    %1181 = vmatprep.subr.bf16.mxu0 0
    %1182 = vmatpush1.bf16.msra.mxu0 0
    %1183 = vmatprep.subr.bf16.mxu0 0
    %1184 = vmatpush1.bf16.msra.mxu0 0
    %1185 = vmatprep.subr.bf16.mxu0 0
    %1186 = vmatpush1.bf16.msra.mxu0 0
    %1187 = vmatprep.subr.bf16.mxu0 0
    %1188 = vmatpush1.bf16.msra.mxu0 0
    %1189 = vmatprep.subr.bf16.mxu0 0
    %1190 = vmatpush1.bf16.msra.mxu0 0
    %1191 = vmatprep.subr.bf16.mxu0 0
    %1192 = vmatpush1.bf16.msra.mxu0 0
    %1193 = vmatprep.subr.bf16.mxu0 0
    %1194 = vmatpush1.bf16.msra.mxu0 0
    %1195 = vmatprep.subr.bf16.mxu0 0
    %1196 = vmatpush1.bf16.msra.mxu0 0
    %1197 = vmatprep.mubr.bf16.mxu0 0
    %1198 = vmatmul.mubr.bf16.gmra.mrb[0].mxu0 %v1163
    %v1199 = vpop.f32.mrb[0].mxu0
    %v1200 = vadd.f32 0.0, %v1199
    %v1201 = vpop.f32.mrb[0].mxu0
    %v1202 = vpop.f32.mrb[0].mxu0
    %v1203 = vadd.f32 0.0, %v1202
    %v1204 = vpop.f32.mrb[0].mxu0
    %1205 = vdwg.mxu0
    %v1206 = vadd.f32 %v1157, %v1200
    %v1207 = vadd.f32 %v1158, %v1203
    %v1208 = vxor.u32 %v1206, 2147483648
    %v1209 = vxor.u32 %v1207, 2147483648
    %v1210 = vmul.f32 %v1208, 1.442695
    %v1211 = vpow.pop %v1210
    %v1212 = vmul.f32 %v1209, 1.442695
    %v1213 = vpow.pop %v1212
    %v1214 = vadd.f32 %v1211, 1.0
    %v1215 = vadd.f32 %v1213, 1.0
    %v1216 = vrcp.pop %v1214
    %v1217 = vmul.f32 1.0, %v1216
    %v1218 = vrcp.pop %v1215
    %v1219 = vmul.f32 1.0, %v1218
    %v1220 = vtanh.pop %v1206
    %v1221 = vtanh.pop %v1207
    %v1222 = vld [vmem:[#allocation6] sm:$0xff]
    %v1223 = vld [vmem:[#allocation6 + $0x8] sm:$0xff]
    %1226 = vrot.lane.b32.xlu0 %v1222, 32
    %v1227 = vpop.permute.xlu0 %1226
    %1228 = vrot.lane.b32.xlu0 %v1223, 32
    %v1229 = vpop.permute.xlu0 %1228
    %v1232 = vmul.f32 %v1217, %v1227
    %v1233 = vmul.f32 %v1219, %v1229
    %1236 = vrot.lane.b32.xlu0 %v1220, 32
    %v1237 = vpop.permute.xlu0 %1236
    %1238 = vrot.lane.b32.xlu0 %v1221, 32
    %v1239 = vpop.permute.xlu0 %1238
    %v1242 = vmul.f32 %v1217, %v1237
    %v1243 = vmul.f32 %v1219, %v1239
    %1246 = vrot.lane.b32.xlu0 %v1242, 32
    %v1247 = vpop.permute.xlu0 %1246
    %1248 = vrot.lane.b32.xlu0 %v1243, 32
    %v1249 = vpop.permute.xlu0 %1248
    %v1252 = vadd.f32 %v1232, %v1247
    %v1253 = vadd.f32 %v1233, %v1249
    %v1254 = vtanh.pop %v1252
    %v1255 = vtanh.pop %v1253
    %1258 = vrot.lane.b32.xlu0 %v1254, 32
    %v1259 = vpop.permute.xlu0 %1258
    %1260 = vrot.lane.b32.xlu0 %v1255, 32
    %v1261 = vpop.permute.xlu0 %1260
    %v1264 = vmul.f32 %v1217, %v1259
    %v1265 = vmul.f32 %v1219, %v1261
    %v1266 = vpack.c.bf16 %v1265, %v1264
    %1269 = vrot.lane.b32.xlu0 %v1252, 96
    %v1270 = vpop.permute.xlu0 %1269
    %1271 = vrot.lane.b32.xlu0 %v1253, 96
    %v1272 = vpop.permute.xlu0 %1271
    %1275 = vst.msk [vmem:[#allocation6] sm:$0xff] %vm185, %v1270
    %1276 = vst.msk [vmem:[#allocation6 + $0x8] sm:$0xff] %vm185, %v1272
    %1278 = vrot.lane.b32.xlu0 %v1266, 64
    %v1279 = vpop.permute.xlu0 %1278
    %1281 = vst.msk [vmem:[#allocation5] sm:$0xff] %vm185, %v1279
    %v1282 = vunpack.c.l.b16 %v1266
    %v1283 = vunpack.c.h.b16 %v1266
    %v1284 = vpack.c.b16 %v1282, %v1282
    %v1285 = vpack.c.b16 %v1283, %v1283
    %1286 = vrot.lane.b32.xlu0 %v1284, 64
    %v1287 = vpop.permute.xlu0 %1286
    %1288 = vrot.lane.b32.xlu0 %v1285, 64
    %v1289 = vpop.permute.xlu0 %1288
    %s1292 = scalar_lea.vmem [#allocation16], 48
    %1293 = vst.msk [vmem:[%s1292] sm:$0xf] %vm458, %v1287
    %1294 = vst.msk [vmem:[%s1292 + $0x4] sm:$0xf] %vm458, %v1289
    %s1295 = scalar_lea.vmem [#allocation4], 112
    %v1296 = vld [vmem:[%s1295] sm:$0xff]
    %v1297 = vld [vmem:[%s1295 + $0x8] sm:$0xff]
    %v1298 = vld [vmem:[#allocation5] sm:$0xff]
    %v1299 = vld [vmem:[#allocation3] sm:$0xff]
    %v1300 = vld [vmem:[#allocation3 + $0x8] sm:$0xff]
    %v1302 = vsel %vm185, %v1298, 0
    %1304 = vmatprep.subr.bf16.mxu0 0
    %1305 = vmatpush1.bf16.msra.mxu0 %v1299
    %1306 = vmatprep.subr.bf16.mxu0 0
    %1307 = vmatpush1.bf16.msra.mxu0 %v1300
    %1308 = vmatprep.subr.bf16.mxu0 0
    %1309 = vmatpush1.bf16.msra.mxu0 0
    %1310 = vmatprep.subr.bf16.mxu0 0
    %1311 = vmatpush1.bf16.msra.mxu0 0
    %1312 = vmatprep.subr.bf16.mxu0 0
    %1313 = vmatpush1.bf16.msra.mxu0 0
    %1314 = vmatprep.subr.bf16.mxu0 0
    %1315 = vmatpush1.bf16.msra.mxu0 0
    %1316 = vmatprep.subr.bf16.mxu0 0
    %1317 = vmatpush1.bf16.msra.mxu0 0
    %1318 = vmatprep.subr.bf16.mxu0 0
    %1319 = vmatpush1.bf16.msra.mxu0 0
    %1320 = vmatprep.subr.bf16.mxu0 0
    %1321 = vmatpush1.bf16.msra.mxu0 0
    %1322 = vmatprep.subr.bf16.mxu0 0
    %1323 = vmatpush1.bf16.msra.mxu0 0
    %1324 = vmatprep.subr.bf16.mxu0 0
    %1325 = vmatpush1.bf16.msra.mxu0 0
    %1326 = vmatprep.subr.bf16.mxu0 0
    %1327 = vmatpush1.bf16.msra.mxu0 0
    %1328 = vmatprep.subr.bf16.mxu0 0
    %1329 = vmatpush1.bf16.msra.mxu0 0
    %1330 = vmatprep.subr.bf16.mxu0 0
    %1331 = vmatpush1.bf16.msra.mxu0 0
    %1332 = vmatprep.subr.bf16.mxu0 0
    %1333 = vmatpush1.bf16.msra.mxu0 0
    %1334 = vmatprep.subr.bf16.mxu0 0
    %1335 = vmatpush1.bf16.msra.mxu0 0
    %1336 = vmatprep.mubr.bf16.mxu0 0
    %1337 = vmatmul.mubr.bf16.gmra.mrb[0].mxu0 %v1302
    %v1338 = vpop.f32.mrb[0].mxu0
    %v1339 = vadd.f32 0.0, %v1338
    %v1340 = vpop.f32.mrb[0].mxu0
    %v1341 = vpop.f32.mrb[0].mxu0
    %v1342 = vadd.f32 0.0, %v1341
    %v1343 = vpop.f32.mrb[0].mxu0
    %1344 = vdwg.mxu0
    %v1345 = vadd.f32 %v1296, %v1339
    %v1346 = vadd.f32 %v1297, %v1342
    %v1347 = vxor.u32 %v1345, 2147483648
    %v1348 = vxor.u32 %v1346, 2147483648
    %v1349 = vmul.f32 %v1347, 1.442695
    %v1350 = vpow.pop %v1349
    %v1351 = vmul.f32 %v1348, 1.442695
    %v1352 = vpow.pop %v1351
    %v1353 = vadd.f32 %v1350, 1.0
    %v1354 = vadd.f32 %v1352, 1.0
    %v1355 = vrcp.pop %v1353
    %v1356 = vmul.f32 1.0, %v1355
    %v1357 = vrcp.pop %v1354
    %v1358 = vmul.f32 1.0, %v1357
    %v1359 = vtanh.pop %v1345
    %v1360 = vtanh.pop %v1346
    %v1361 = vld [vmem:[#allocation6] sm:$0xff]
    %v1362 = vld [vmem:[#allocation6 + $0x8] sm:$0xff]
    %1365 = vrot.lane.b32.xlu0 %v1361, 32
    %v1366 = vpop.permute.xlu0 %1365
    %1367 = vrot.lane.b32.xlu0 %v1362, 32
    %v1368 = vpop.permute.xlu0 %1367
    %v1371 = vmul.f32 %v1356, %v1366
    %v1372 = vmul.f32 %v1358, %v1368
    %1375 = vrot.lane.b32.xlu0 %v1359, 32
    %v1376 = vpop.permute.xlu0 %1375
    %1377 = vrot.lane.b32.xlu0 %v1360, 32
    %v1378 = vpop.permute.xlu0 %1377
    %v1381 = vmul.f32 %v1356, %v1376
    %v1382 = vmul.f32 %v1358, %v1378
    %1385 = vrot.lane.b32.xlu0 %v1381, 32
    %v1386 = vpop.permute.xlu0 %1385
    %1387 = vrot.lane.b32.xlu0 %v1382, 32
    %v1388 = vpop.permute.xlu0 %1387
    %v1391 = vadd.f32 %v1371, %v1386
    %v1392 = vadd.f32 %v1372, %v1388
    %v1393 = vtanh.pop %v1391
    %v1394 = vtanh.pop %v1392
    %1397 = vrot.lane.b32.xlu0 %v1393, 32
    %v1398 = vpop.permute.xlu0 %1397
    %1399 = vrot.lane.b32.xlu0 %v1394, 32
    %v1400 = vpop.permute.xlu0 %1399
    %v1403 = vmul.f32 %v1356, %v1398
    %v1404 = vmul.f32 %v1358, %v1400
    %v1405 = vpack.c.bf16 %v1404, %v1403
    %1408 = vrot.lane.b32.xlu0 %v1391, 96
    %v1409 = vpop.permute.xlu0 %1408
    %1410 = vrot.lane.b32.xlu0 %v1392, 96
    %v1411 = vpop.permute.xlu0 %1410
    %1414 = vst.msk [vmem:[#allocation6] sm:$0xff] %vm185, %v1409
    %1415 = vst.msk [vmem:[#allocation6 + $0x8] sm:$0xff] %vm185, %v1411
    %1417 = vrot.lane.b32.xlu0 %v1405, 64
    %v1418 = vpop.permute.xlu0 %1417
    %1420 = vst.msk [vmem:[#allocation5] sm:$0xff] %vm185, %v1418
    %v1421 = vunpack.c.l.b16 %v1405
    %v1422 = vunpack.c.h.b16 %v1405
    %v1423 = vpack.c.b16 %v1421, %v1421
    %v1424 = vpack.c.b16 %v1422, %v1422
    %1425 = vrot.lane.b32.xlu0 %v1423, 64
    %v1426 = vpop.permute.xlu0 %1425
    %1427 = vrot.lane.b32.xlu0 %v1424, 64
    %v1428 = vpop.permute.xlu0 %1427
    %s1431 = scalar_lea.vmem [#allocation16], 56
    %1432 = vst.msk [vmem:[%s1431] sm:$0xf] %vm458, %v1426
    %1433 = vst.msk [vmem:[%s1431 + $0x4] sm:$0xf] %vm458, %v1428
    %v1434 = vld [vmem:[#allocation5] sm:$0xff]
    %v1435 = vunpack.c.l.bf16 %v1434
    %v1436 = vunpack.c.h.bf16 %v1434
    %1437 = vst.msk [vmem:[#allocation17] sm:$0xff] %vm185, %v1435
    %1438 = vst.msk [vmem:[#allocation17 + $0x8] sm:$0xff] %vm185, %v1436
    %v1439 = vld [vmem:[#allocation6] sm:$0xff]
    %v1440 = vld [vmem:[#allocation6 + $0x8] sm:$0xff]
    %1441 = vst.msk [vmem:[#allocation19] sm:$0xff] %vm185, %v1439
    %1442 = vst.msk [vmem:[#allocation19 + $0x8] sm:$0xff] %vm185, %v1440
    // Predicated region
    $region46: #{tpu_custom_call.1} parent=1 // pred_check
      _
    $region47: #{tpu_custom_call.1} parent=1 // pred_check_branch
      %1444 = sbr.rel (0) target = $region49
    $region48: #{tpu_custom_call.1} parent=1 // pred_region
      %s1446 = ssub.s32 1024, 1024
      %1447 = vsyncadd [#allocation10], %s1446
      %s1448 = sshll.u32 [#allocation16], 4
      %s1449 = int_to_ptr.vmem [resolvable:$true] %s1448
      %1454 = dma.vmem_to_hbm [thread:$0]  %s1449, 1024, %s6, [#allocation10], 64, 64, 4
    $region49: #{tpu_custom_call.1} parent=1 // pred_fallthru
      _
    // Predicated region
    $region50: #{tpu_custom_call.1} parent=1 // pred_check
      _
    $region51: #{tpu_custom_call.1} parent=1 // pred_check_branch
      %1456 = sbr.rel (0) target = $region53
    $region52: #{tpu_custom_call.1} parent=1 // pred_region
      %s1458 = ssub.s32 256, 256
      %1459 = vsyncadd [#allocation18], %s1458
      %s1460 = sshll.u32 [#allocation17], 4
      %s1461 = int_to_ptr.vmem [resolvable:$true] %s1460
      %1466 = dma.vmem_to_hbm [thread:$0]  %s1461, 256, %s7, [#allocation18], 128, 128, 8
    $region53: #{tpu_custom_call.1} parent=1 // pred_fallthru
      _
    // Predicated region
    $region54: #{tpu_custom_call.1} parent=1 // pred_check
      _
    $region55: #{tpu_custom_call.1} parent=1 // pred_check_branch
      %1468 = sbr.rel (0) target = $region57
    $region56: #{tpu_custom_call.1} parent=1 // pred_region
      %s1470 = ssub.s32 256, 256
      %1471 = vsyncadd [#allocation18], %s1470
      %s1472 = sshll.u32 [#allocation19], 4
      %s1473 = int_to_ptr.vmem [resolvable:$true] %s1472
      %1478 = dma.vmem_to_hbm [thread:$0]  %s1473, 256, %s8, [#allocation18], 128, 128, 8
    $region57: #{tpu_custom_call.1} parent=1 // pred_fallthru
      _
    // Predicated region
    $region58: #{tpu_custom_call.1} parent=1 // pred_check
      _
    $region59: #{tpu_custom_call.1} parent=1 // pred_check_branch
      %1480 = sbr.rel (0) target = $region61
    $region60: #{tpu_custom_call.1} parent=1 // pred_region
      %1481 = dma.done [#allocation10], 1024
    $region61: #{tpu_custom_call.1} parent=1 // pred_fallthru
      _
    // Predicated region
    $region62: #{tpu_custom_call.1} parent=1 // pred_check
      _
    $region63: #{tpu_custom_call.1} parent=1 // pred_check_branch
      %1483 = sbr.rel (0) target = $region65
    $region64: #{tpu_custom_call.1} parent=1 // pred_region
      %1484 = dma.done [#allocation18], 256
    $region65: #{tpu_custom_call.1} parent=1 // pred_fallthru
      _
    // Predicated region
    $region66: #{tpu_custom_call.1} parent=1 // pred_check
      _
    $region67: #{tpu_custom_call.1} parent=1 // pred_check_branch
      %1486 = sbr.rel (0) target = $region69
    $region68: #{tpu_custom_call.1} parent=1 // pred_region
      %1487 = dma.done [#allocation18], 256
    $region69: #{tpu_custom_call.1} parent=1 // pred_fallthru
      _
    %1488 = vsyncpa [#allocation9], 1
    %1489 = vsyncpa [#allocation12], 1
    %1490 = vsyncpa [#allocation15], 1
    %1491 = vsyncpa [#allocation10], 1
    %1492 = vsyncpa [#allocation18], 1
  %1493 = vsyncmov [#allocation7]
  %s1494 = vpop.sfrf %1493
  %p1495 = scmp.eq.s32.totalorder %s1494, 0
  %p1496 = pneg %p1495
  %1498 = shalt.err (%p1496)
  %s1499 = scalar_lea.sflag [#allocation7], 1
  %1500 = vsyncmov %s1499
  %s1501 = vpop.sfrf %1500
  %p1502 = scmp.eq.s32.totalorder %s1501, 0
  %p1503 = pneg %p1502
  %1505 = shalt.err (%p1503)

</llo_original>
